<compile_context>
chip_gen: v7x
topology: tpu7x:2x2x1
jax: 0.10.0
libtpu: 0.0.40
codegen_flags: <defaults>
</compile_context>

<pallas_src>
import math
import functools

import numpy as np

import jax
import jax.numpy as jnp
from jax.experimental import pallas as pl
from jax.experimental.pallas import tpu as pltpu


def _cdiv(a: int, b: int) -> int:
    return -(-a // b)


def _round_up(x: int, m: int) -> int:
    return _cdiv(x, m) * m


def _vmem_capacity_bytes() -> int:
    try:
        return int(pltpu.get_tpu_info().vmem_capacity_bytes)
    except Exception:
        return 64 << 20  # conservative (v7x physical VMEM)


# --------------------------------------------------------------------------
# Kernel (single, unified, write-only)
# --------------------------------------------------------------------------

def _sinpos_kernel(freq_ref, off_ref, o_ref, *, tile_rows: int, width: int):
    """One (tile_rows, width) lane-dense tile of the sinusoidal table.

    angle[row, c] = row_global * freq[c] + off[c]
      freq[c] = r * inv_freq(feature(c))                  (0 on pad/tail cols)
      off[c]  = pos_off(c) * inv_freq(feature(c)) + phase(c)
    phase(c) is 0 for sin columns and pi/2 for cos columns, so a single sin
    covers both halves (one transcendental per element) and the whole tile
    is written with one full-width unmasked store.
    """
    base = pl.program_id(0) * tile_rows
    # int32 iota + one convert per vreg (kept: float iota lowering is
    # chip-dependent; the mul/add folding into the host tables is the win).
    row = (base + jax.lax.broadcasted_iota(jnp.int32, (tile_rows, width), 0)
           ).astype(jnp.float32)
    o_ref[...] = jnp.sin(row * freq_ref[...] + off_ref[...])


# --------------------------------------------------------------------------
# Table builder (wrapper around pallas_call)
# --------------------------------------------------------------------------

def _build_table(num_rows: int, dim: int, padding_idx) -> jnp.ndarray:
    """Build the (num_rows, dim) float32 sinusoidal table on TPU."""
    assert dim >= 2, "embedding_dim must be >= 2"
    # float32 row indices are exact only up to 2^24 (max_positions() is 1e5,
    # so this never triggers in practice).
    assert num_rows <= (1 << 24), "positions beyond 2^24 lose f32 precision"

    half = dim // 2
    denom = max(half - 1, 1)          # guard half == 1 (reference divides by 0)
    scale = np.float32(-(math.log(10000.0) / denom))

    packed = (dim < 128) and (dim % 2 == 0) and (128 % dim == 0)
    if packed:
        r = 128 // dim                # positions packed per 128-lane row
        width = 128
        rows = _cdiv(num_rows, r)
    else:
        r = 1
        width = _round_up(dim, 128)   # lane-dense padded width
        rows = num_rows

    # Host-side column tables: freq (row multiplier) and off (position offset
    # * inv_freq + sin/cos phase).  Pad / odd-dim tail columns -> 0.
    c = np.arange(width)
    if packed:
        f = c % dim
        pos_off = (c // dim).astype(np.float32)
    else:
        f = c
        pos_off = np.zeros(width, np.float32)
    valid = f < 2 * half
    is_cos = valid & (f >= half)
    k = np.where(is_cos, f - half, f).astype(np.float32)
    inv = np.exp(k * scale).astype(np.float32)            # same f32 exp as ref
    freq_row = np.where(valid, np.float32(r) * inv, np.float32(0.0)
                        ).astype(np.float32)
    phase = np.where(is_cos, np.float32(math.pi / 2.0), np.float32(0.0))
    off_row = np.where(valid, pos_off * inv + phase, np.float32(0.0)
                       ).astype(np.float32)
    freq_in = jnp.asarray(freq_row[None, :])
    off_in = jnp.asarray(off_row[None, :])

    # ---- Tiling: balanced tiles sized from num_tiles (not the other way) ----
    vmem_cap = _vmem_capacity_bytes()
    # 8 MiB per pipeline buffer on v5e/v6e (128 MiB VMEM, slowest HBM);
    # 4 MiB on v7x (64 MiB VMEM).
    per_buf_budget = (8 << 20) if vmem_cap > (64 << 20) else (4 << 20)
    max_tile_rows = max(8, (per_buf_budget // (width * 4)) // 8 * 8)
    num_tiles = _cdiv(rows, max_tile_rows)
    if num_tiles < 2 and rows > 8:
        num_tiles = 2                 # let "parallel" shard across v7x's 2 TCs
    tile_rows = _round_up(_cdiv(rows, num_tiles), 8)
    rows_pad = num_tiles * tile_rows  # <= rows + 8*num_tiles of padding

    tile_bytes = tile_rows * width * 4
    vmem_limit = int(min(max(4 * tile_bytes + (2 << 20), 16 << 20),
                         vmem_cap // 2))

    cost = pl.CostEstimate(
        flops=2 * rows_pad * width,            # one fma per element
        transcendentals=rows_pad * width,      # exactly one sin per element
        bytes_accessed=rows_pad * width * 4 + 2 * width * 4,
    )

    kernel = functools.partial(_sinpos_kernel, tile_rows=tile_rows, width=width)
    out = pl.pallas_call(
        kernel,
        out_shape=jax.ShapeDtypeStruct((rows_pad, width), jnp.float32),
        grid=(num_tiles,),
        in_specs=[pl.BlockSpec((1, width), lambda i: (0, 0)),
                  pl.BlockSpec((1, width), lambda i: (0, 0))],
        out_specs=pl.BlockSpec((tile_rows, width), lambda i: (i, 0)),
        compiler_params=pltpu.CompilerParams(
            dimension_semantics=("parallel",),
            vmem_limit_bytes=vmem_limit,
        ),
        cost_estimate=cost,
    )(freq_in, off_in)

    if packed:
        # Row-major identical memory: reshape back to (rows, dim) is free.
        table = out.reshape(rows_pad * r, dim)[:num_rows]
    else:
        table = out[:num_rows, :dim]

    if padding_idx is not None:
        # Padding row zeroed once here instead of per-tile inside the kernel.
        table = table.at[padding_idx].set(0.0)
    return table


# --------------------------------------------------------------------------
# Module wrapper (mirrors the PyTorch forward)
# --------------------------------------------------------------------------

class SinusoidalPositionalEmbeddingPallas:
    """JAX/Pallas equivalent of the PyTorch SinusoidalPositionalEmbedding."""

    def __init__(self, embedding_dim: int, padding_idx, init_size: int = 1024):
        self.embedding_dim = embedding_dim
        self.padding_idx = padding_idx
        self.init_size = init_size
        self._cached_table = None
        self._cached_len = 0

    def _ensure_table(self, seq_len: int) -> jnp.ndarray:
        if self._cached_table is None or seq_len > self._cached_len:
            # Grow in power-of-two quanta so creeping seq_len does not
            # retrace/recompile the pallas_call on every call.
            build_n = pl.next_power_of_2(max(seq_len, self.init_size, 8))
            self._cached_table = _build_table(
                build_n, self.embedding_dim, self.padding_idx)
            self._cached_len = build_n
        return self._cached_table

    def __call__(self, x: jnp.ndarray) -> jnp.ndarray:
        # x: (bsz, seq_len, feat); only seq_len matters, like the torch forward.
        _, seq_len, _ = x.shape
        table = self._ensure_table(seq_len)
        return table[None, :seq_len, :]        # (1, seq_len, embedding_dim)

    def max_positions(self):
        return int(100000.0)


# --------------------------------------------------------------------------
# Reference + self test
# --------------------------------------------------------------------------

def _reference_numpy(seq_len: int, embedding_dim: int, padding_idx):
    """Pure-numpy port of SinusoidalPositionalEmbedding.get_embedding."""
    half_dim = embedding_dim // 2
    emb = math.log(10000) / (half_dim - 1)
    emb = np.exp(np.arange(half_dim, dtype=np.float32) * -emb)
    emb = np.arange(seq_len, dtype=np.float32)[:, None] * emb[None, :]
    emb = np.concatenate([np.sin(emb), np.cos(emb)], axis=1).reshape(seq_len, -1)
    if embedding_dim % 2 == 1:
        emb = np.concatenate([emb, np.zeros((seq_len, 1), np.float32)], axis=1)
    if padding_idx is not None:
        emb[padding_idx, :] = 0
    return emb[None, :, :].astype(np.float32)


if __name__ == "__main__":
    key = jax.random.PRNGKey(0)

    # Case 1 (packed lane-dense path): dim = 32 < 128, padding_idx = 0.
    embedding_dim, padding_idx = 32, 0
    bsz, seq_len, feat = 2, 8, 32
    x = jax.random.normal(key, (bsz, seq_len, feat), dtype=jnp.float32)
    module = SinusoidalPositionalEmbeddingPallas(embedding_dim, padding_idx)
    out = jax.block_until_ready(module(x))
    ref = _reference_numpy(seq_len, embedding_dim, padding_idx)
    assert out.shape == (1, seq_len, embedding_dim), out.shape
    np.testing.assert_allclose(np.asarray(out), ref, rtol=1e-5, atol=1e-5)

    # Case 2 (wide path): dim = 256 >= 128, seq_len not a multiple of 8.
    module2 = SinusoidalPositionalEmbeddingPallas(256, 1, init_size=16)
    x2 = jnp.zeros((1, 12, 256), jnp.float32)
    out2 = jax.block_until_ready(module2(x2))
    ref2 = _reference_numpy(12, 256, 1)
    assert out2.shape == (1, 12, 256), out2.shape
    np.testing.assert_allclose(np.asarray(out2), ref2, rtol=1e-5, atol=1e-4)

    # Case 3 (padded-width path): dim = 48 does not divide 128, seq_len = 9.
    module3 = SinusoidalPositionalEmbeddingPallas(48, 2, init_size=64)
    x3 = jnp.zeros((1, 9, 48), jnp.float32)
    out3 = jax.block_until_ready(module3(x3))
    ref3 = _reference_numpy(9, 48, 2)
    assert out3.shape == (1, 9, 48), out3.shape
    np.testing.assert_allclose(np.asarray(out3), ref3, rtol=1e-5, atol=1e-5)

    print("KERNEL_OK")
</pallas_src>

<mosaic_0001>
module attributes {stable_mosaic.version = 11 : i64} {
  func.func @_sinpos_kernel(%arg0: i32, %arg1: memref<1x128xf32, #tpu.memory_space<vmem>>, %arg2: memref<1x128xf32, #tpu.memory_space<vmem>>, %arg3: memref<128x128xf32, #tpu.memory_space<vmem>>) attributes {dimension_semantics = [#tpu.dimension_semantics<parallel>], iteration_bounds = array<i64: 2>, scalar_prefetch = 0 : i64, scratch_operands = 0 : i64, tpu.core_type = #tpu.core_type<tc>, window_params = [{pipeline_mode = #tpu.pipeline_mode<synchronous>, transform_indices = @transform_0, window_bounds = array<i64: 1, 128>}, {pipeline_mode = #tpu.pipeline_mode<synchronous>, transform_indices = @transform_1, window_bounds = array<i64: 1, 128>}, {transform_indices = @transform_2, window_bounds = array<i64: 128, 128>}]} {
    %c128_i32 = arith.constant 128 : i32
    %0 = arith.muli %arg0, %c128_i32 : i32
    %1 = tpu.iota {dimensions = array<i32: 0>} : vector<128x128xi32>
    %2 = vector.broadcast %0 : i32 to vector<128x128xi32>
    %3 = arith.addi %2, %1 : vector<128x128xi32>
    %4 = arith.sitofp %3 : vector<128x128xi32> to vector<128x128xf32>
    %c0 = arith.constant 0 : index
    %c0_0 = arith.constant 0 : index
    %5 = vector.load %arg1[%c0, %c0_0] : memref<1x128xf32, #tpu.memory_space<vmem>>, vector<1x128xf32>
    %6 = vector.broadcast %5 : vector<1x128xf32> to vector<128x128xf32>
    %7 = arith.mulf %4, %6 : vector<128x128xf32>
    %c0_1 = arith.constant 0 : index
    %c0_2 = arith.constant 0 : index
    %8 = vector.load %arg2[%c0_1, %c0_2] : memref<1x128xf32, #tpu.memory_space<vmem>>, vector<1x128xf32>
    %9 = vector.broadcast %8 : vector<1x128xf32> to vector<128x128xf32>
    %10 = arith.addf %7, %9 : vector<128x128xf32>
    %11 = math.sin %10 : vector<128x128xf32>
    %c0_3 = arith.constant 0 : index
    %c0_4 = arith.constant 0 : index
    %12 = vector.load %arg3[%c0_3, %c0_4] : memref<128x128xf32, #tpu.memory_space<vmem>>, vector<128x128xf32>
    tpu.vector_store %arg3[%c0_3, %c0_4], %11 {strides = array<i32>} : memref<128x128xf32, #tpu.memory_space<vmem>>, vector<128x128xf32>,
    return
  }
  func.func @transform_0(%arg0: i32) -> (i32, i32) {
    %c0_i32 = arith.constant 0 : i32
    %c0_i32_0 = arith.constant 0 : i32
    %c0_i32_1 = arith.constant 0 : i32
    return %c0_i32, %c0_i32_0 : i32, i32
  }
  func.func @transform_1(%arg0: i32) -> (i32, i32) {
    %c0_i32 = arith.constant 0 : i32
    %c0_i32_0 = arith.constant 0 : i32
    %c0_i32_1 = arith.constant 0 : i32
    return %c0_i32, %c0_i32_0 : i32, i32
  }
  func.func @transform_2(%arg0: i32) -> (i32, i32) {
    %c0_i32 = arith.constant 0 : i32
    %c0_i32_0 = arith.constant 0 : i32
    return %arg0, %c0_i32 : i32, i32
  }
}

</mosaic_0001>

<llo_original>
// kernel: tpu_custom_call.1
$region0: #{tpu_custom_call.1}
  #allocation0 [shape = 'u32[]', space=smem, size = 0x4, offset = 0x4, fixed_abs, tag = 'smem constant byte address 0x4 - core index']
  #allocation1 [shape = 'u32[144,128]{1,0:T(1,128)}', space=vmem, size = 0x12000, scoped, tag = 'internal scratch']
  %s0 = inlined_call_operand.hbm [shape: f32[1,128], index: 0, kind: input, shape index: {}]
  %s1 = inlined_call_operand.vmem [shape: f32[1,128], index: 1, kind: input, shape index: {}]
  %s2 = inlined_call_operand.hbm [shape: f32[256,128], index: 2, kind: output, shape index: {}]
  %s3 = sld [smem:[#allocation0]]
  $region45: #{tpu_custom_call.1} parent=0
    _
  %s5 = ssub.s32 1, %s3
  %s6 = scalar_select 0, %s5, %s3
  $region1: #{tpu_custom_call.1} parent=0
    #allocation2 [shape = 'u8[512]{0}', space=vmem, size = 0x400, scoped, tag = 'input window, operand 0, single buffered']
    #allocation3 [shape = 's32[2]{0}', space=sflag, size = 0x8, scoped, tag = 'scoped memory for tpu_custom_call.1']
    #allocation4 [shape = 's32[2]{0}', space=sflag, size = 0x8, scoped, tag = 'scoped memory for tpu_custom_call.1']
    #allocation5 [shape = 'u8[131072]{0}', space=vmem, size = 0x20000, scoped, tag = 'output window, operand 0']
    %7 = vsyncpa [#allocation3], 0
    %8 = vsyncpa [#allocation4], 0
    %s9 = scalar_lea.sflag [#allocation4], 1
    %10 = vsyncpa %s9, 0
    loop: start=0, step=1, limit=4
    $region2: #{tpu_custom_call.1} parent=1 // loop_pre_header
      _
    $region3: #{tpu_custom_call.1} parent=1 // loop_header
      %s12 = sphi 0, %s16
      %p13 = scmp.ge.s32.totalorder %s12, 4
      %s20 = sphi 0, %s20
      %s22 = sphi 0, %s20
      %s23 = sphi 0, %s22
      %s37 = sphi 0, %s23
      %s41 = sphi 0, %s41
      %s43 = sphi 0, %s41
      %s44 = sphi 0, %s43
      %s58 = sphi 0, %s44
      %s64 = sphi 0, %s66
      %s67 = sphi 0, %s64
      %s68 = sphi 0, %s67
      %s84 = sphi 0, %s68
    $region4: #{tpu_custom_call.1} parent=1 // loop_header_branch
      %15 = sbr.rel (%p13) target = $region8
    $region5: #{tpu_custom_call.1} parent=1 // loop_body
      %s17 = ssub.s32 %s12, 1
      %s18 = ssub.s32 %s12, 2
      %s19 = sadd.s32 %s12, 1
      %s21 = sadd.s32 %s20, 1
      %p24 = scmp.eq.s32.totalorder %s12, 1
      %p25 = scmp.ne.s32.totalorder %s20, %s22
      %p26 = scmp.eq.s32.totalorder %s12, 0
      %p27 = por %p25, %p26
      %p28 = scmp.ne.s32.totalorder %s20, %s22
      %p29 = scmp.eq.s32.totalorder %s17, 1
      %p30 = por %p28, %p29
      %p31 = scmp.ne.s32.totalorder %s22, %s23
      %p32 = scmp.eq.s32.totalorder %s17, 0
      %p33 = por %p31, %p32
      %p34 = scmp.ne.s32.totalorder %s22, %s23
      %p35 = scmp.eq.s32.totalorder %s18, 1
      %p36 = por %p34, %p35
      %p38 = scmp.ne.s32.totalorder %s23, %s37
      %p39 = scmp.eq.s32.totalorder %s18, 0
      %p40 = por %p38, %p39
      %s42 = sadd.s32 %s41, 1
      %p45 = scmp.eq.s32.totalorder %s12, 1
      %p46 = scmp.ne.s32.totalorder %s41, %s43
      %p47 = scmp.eq.s32.totalorder %s12, 0
      %p48 = por %p46, %p47
      %p49 = scmp.ne.s32.totalorder %s41, %s43
      %p50 = scmp.eq.s32.totalorder %s17, 1
      %p51 = por %p49, %p50
      %p52 = scmp.ne.s32.totalorder %s43, %s44
      %p53 = scmp.eq.s32.totalorder %s17, 0
      %p54 = por %p52, %p53
      %p55 = scmp.ne.s32.totalorder %s43, %s44
      %p56 = scmp.eq.s32.totalorder %s18, 1
      %p57 = por %p55, %p56
      %p59 = scmp.ne.s32.totalorder %s44, %s58
      %p60 = scmp.eq.s32.totalorder %s18, 0
      %p61 = por %p59, %p60
      %s62 = ssub.s32 %s12, %s19
      %p63 = scmp.eq.s32.totalorder %s62, 0
      %s65 = sadd.s32 %s64, 1
      %s66 = scalar_select %p63, %s64, %s65
      %p69 = pneg %p63
      %p70 = scmp.eq.s32.totalorder %s12, 1
      %p71 = por %p69, %p70
      %p72 = scmp.ne.s32.totalorder %s64, %s67
      %p73 = scmp.eq.s32.totalorder %s12, 0
      %p74 = por %p72, %p73
      %p75 = scmp.ne.s32.totalorder %s64, %s67
      %p76 = scmp.eq.s32.totalorder %s17, 1
      %p77 = por %p75, %p76
      %p78 = scmp.ne.s32.totalorder %s67, %s68
      %p79 = scmp.eq.s32.totalorder %s17, 0
      %p80 = por %p78, %p79
      %p81 = scmp.ne.s32.totalorder %s67, %s68
      %p82 = scmp.eq.s32.totalorder %s18, 1
      %p83 = por %p81, %p82
      %p85 = scmp.ne.s32.totalorder %s68, %s84
      %p86 = scmp.eq.s32.totalorder %s18, 0
      %p87 = por %p85, %p86
      %p88 = scmp.le.s32.totalorder 1, %s12
      %p89 = scmp.lt.s32.totalorder %s12, 3
      %p90 = pnand %p88, %p89
      %p91 = pneg %p90
      // Predicated region
      $region9: #{tpu_custom_call.1} parent=5 // pred_check
        _
      $region10: #{tpu_custom_call.1} parent=5 // pred_check_branch
        %93 = sbr.rel (%p90) target = $region12
      $region11: #{tpu_custom_call.1} parent=5 // pred_region
        %s94 = ssub.s32 %s12, 1
        // Predicated region
        $region13: #{tpu_custom_call.1} parent=11 // pred_check
          %p95 = pneg %p33
        $region14: #{tpu_custom_call.1} parent=11 // pred_check_branch
          %97 = sbr.rel (%p95) target = $region16
        $region15: #{tpu_custom_call.1} parent=11 // pred_region
          %s99 = ssub.s32 16, 16
          %100 = vsyncadd [#allocation3], %s99
          %s102 = sshll.u32 [#allocation2], 4
          %s103 = int_to_ptr.vmem [resolvable:$true] %s102
          %105 = dma.hbm_to_vmem [thread:$0]  %s0, 16, %s103, [#allocation3]
        $region16: #{tpu_custom_call.1} parent=11 // pred_fallthru
          _
        // Predicated region
        $region17: #{tpu_custom_call.1} parent=11 // pred_check
          %p106 = pneg %p54
        $region18: #{tpu_custom_call.1} parent=11 // pred_check_branch
          %108 = sbr.rel (%p106) target = $region20
        $region19: #{tpu_custom_call.1} parent=11 // pred_region
          _
        $region20: #{tpu_custom_call.1} parent=11 // pred_fallthru
          _
      $region12: #{tpu_custom_call.1} parent=5 // pred_fallthru
        _
      %p109 = scmp.lt.s32.totalorder %s12, 2
      // Predicated region
      $region21: #{tpu_custom_call.1} parent=5 // pred_check
        %p110 = pneg %p109
      $region22: #{tpu_custom_call.1} parent=5 // pred_check_branch
        %112 = sbr.rel (%p110) target = $region24
      $region23: #{tpu_custom_call.1} parent=5 // pred_region
        _
      $region24: #{tpu_custom_call.1} parent=5 // pred_fallthru
        _
      %p113 = scmp.le.s32.totalorder 1, %s12
      %p114 = scmp.lt.s32.totalorder %s12, 3
      %p115 = pnand %p113, %p114
      %p116 = pneg %p115
      // Predicated region
      $region25: #{tpu_custom_call.1} parent=5 // pred_check
        _
      $region26: #{tpu_custom_call.1} parent=5 // pred_check_branch
        %118 = sbr.rel (%p115) target = $region28
      $region27: #{tpu_custom_call.1} parent=5 // pred_region
        %s119 = ssub.s32 %s12, 1
        // Predicated region
        $region29: #{tpu_custom_call.1} parent=27 // pred_check
          %p120 = pneg %p33
        $region30: #{tpu_custom_call.1} parent=27 // pred_check_branch
          %122 = sbr.rel (%p120) target = $region32
        $region31: #{tpu_custom_call.1} parent=27 // pred_region
          %123 = dma.done [#allocation3], 16
        $region32: #{tpu_custom_call.1} parent=27 // pred_fallthru
          _
        %p124 = pneg %p33
        %p125 = pneg %p30
        %p126 = pneg %p54
        %p127 = pneg %p51
        %p128 = pneg %p80
        %p129 = pneg %p77
        %s130 = sand.u32 %s67, 1
        %s131 = scalar_lea.sflag [#allocation4], %s130
        %s132 = sand.u32 %s67, 1
        %s133 = smul.addr %s132, 128
        %s134 = scalar_lea.vmem [#allocation5], %s133
        %s135 = smul.u32 16, %s17
        %s136 = smul.u32 %s17, 128
        %v137 = vlaneseq
        %v138 = vshrl.u32 %v137, 7
        %v139 = vadd.s32 %v138, 8
        %v140 = vadd.s32 %v138, 16
        %v141 = vadd.s32 %v138, 24
        %v142 = vadd.s32 %v138, 32
        %v143 = vadd.s32 %v138, 40
        %v144 = vadd.s32 %v138, 48
        %v145 = vadd.s32 %v138, 56
        %v146 = vadd.s32 %v138, 64
        %v147 = vadd.s32 %v138, 72
        %v148 = vadd.s32 %v138, 80
        %v149 = vadd.s32 %v138, 88
        %v150 = vadd.s32 %v138, 96
        %v151 = vadd.s32 %v138, 104
        %v152 = vadd.s32 %v138, 112
        %v153 = vadd.s32 %v138, 120
        %v154 = vstv %s136
        %v155 = vadd.s32 %v154, %v138
        %v156 = vadd.s32 %v154, %v139
        %v157 = vadd.s32 %v154, %v140
        %v158 = vadd.s32 %v154, %v141
        %v159 = vadd.s32 %v154, %v142
        %v160 = vadd.s32 %v154, %v143
        %v161 = vadd.s32 %v154, %v144
        %v162 = vadd.s32 %v154, %v145
        %v163 = vadd.s32 %v154, %v146
        %v164 = vadd.s32 %v154, %v147
        %v165 = vadd.s32 %v154, %v148
        %v166 = vadd.s32 %v154, %v149
        %v167 = vadd.s32 %v154, %v150
        %v168 = vadd.s32 %v154, %v151
        %v169 = vadd.s32 %v154, %v152
        %v170 = vadd.s32 %v154, %v153
        %v171 = vcvt.s32.f32 %v155
        %v172 = vcvt.s32.f32 %v156
        %v173 = vcvt.s32.f32 %v157
        %v174 = vcvt.s32.f32 %v158
        %v175 = vcvt.s32.f32 %v159
        %v176 = vcvt.s32.f32 %v160
        %v177 = vcvt.s32.f32 %v161
        %v178 = vcvt.s32.f32 %v162
        %v179 = vcvt.s32.f32 %v163
        %v180 = vcvt.s32.f32 %v164
        %v181 = vcvt.s32.f32 %v165
        %v182 = vcvt.s32.f32 %v166
        %v183 = vcvt.s32.f32 %v167
        %v184 = vcvt.s32.f32 %v168
        %v185 = vcvt.s32.f32 %v169
        %v186 = vcvt.s32.f32 %v170
        %v187 = vld [vmem:[#allocation2] sm:$0x1]
        %v189 = vlaneseq
        %v190 = vshrl.u32 %v189, 7
        %v191 = vsub.s32 0, %v190
        %v192 = vrot.slane %v187, %v191
        %v194 = vmul.f32 %v171, %v192
        %v195 = vmul.f32 %v172, %v192
        %v196 = vmul.f32 %v173, %v192
        %v197 = vmul.f32 %v174, %v192
        %v198 = vmul.f32 %v175, %v192
        %v199 = vmul.f32 %v176, %v192
        %v200 = vmul.f32 %v177, %v192
        %v201 = vmul.f32 %v178, %v192
        %v202 = vmul.f32 %v179, %v192
        %v203 = vmul.f32 %v180, %v192
        %v204 = vmul.f32 %v181, %v192
        %v205 = vmul.f32 %v182, %v192
        %v206 = vmul.f32 %v183, %v192
        %v207 = vmul.f32 %v184, %v192
        %v208 = vmul.f32 %v185, %v192
        %v209 = vmul.f32 %v186, %v192
        %v210 = vld [vmem:[%s1] sm:$0x1]
        %v212 = vlaneseq
        %v213 = vshrl.u32 %v212, 7
        %v214 = vsub.s32 0, %v213
        %v215 = vrot.slane %v210, %v214
        %v217 = vadd.f32 %v194, %v215
        %v218 = vadd.f32 %v195, %v215
        %v219 = vadd.f32 %v196, %v215
        %v220 = vadd.f32 %v197, %v215
        %v221 = vadd.f32 %v198, %v215
        %v222 = vadd.f32 %v199, %v215
        %v223 = vadd.f32 %v200, %v215
        %v224 = vadd.f32 %v201, %v215
        %v225 = vadd.f32 %v202, %v215
        %v226 = vadd.f32 %v203, %v215
        %v227 = vadd.f32 %v204, %v215
        %v228 = vadd.f32 %v205, %v215
        %v229 = vadd.f32 %v206, %v215
        %v230 = vadd.f32 %v207, %v215
        %v231 = vadd.f32 %v208, %v215
        %v232 = vadd.f32 %v209, %v215
        %v233 = vand.u32 2147483647, %v217
        %vm234 = vcmp.le.f32.partialorder %v233, 0.7853982
        %vm235 = vcmp.lt.s32.totalorder %v217, 0
        %v236 = vand.u32 %v217, 2139095040
        %v237 = vshrl.u32 %v236, 23
        %v238 = vsub.s32 %v237, 127
        %v239 = vand.u32 2147483647, %v217
        %v240 = vand.u32 %v239, 8388607
        %v241 = vor.u32 %v240, 8388608
        %v242 = vsub.s32 0, %v241
        %v243 = vadd.s32 %v238, 1
        %vm244 = vcmp.gt.s32.totalorder %v243, 0
        %v245 = vsel %vm244, %v243, 0
        %v246 = vshrl.u32 %v245, 5
        %v247 = vand.u32 %v245, 31
        %v248 = vsub.s32 32, %v247
        %v249 = vshrl.u32 683565275, %v248
        %v250 = vshll.u32 683565275, %v247
        %v251 = vshrl.u32 2475754826, %v248
        %v252 = vor.u32 %v250, %v251
        %v253 = vshll.u32 2475754826, %v247
        %v254 = vshrl.u32 2131351028, %v248
        %v255 = vor.u32 %v253, %v254
        %v256 = vshll.u32 2131351028, %v247
        %v257 = vshrl.u32 2102212464, %v248
        %v258 = vor.u32 %v256, %v257
        %v259 = vshll.u32 2102212464, %v247
        %v260 = vshrl.u32 920167782, %v248
        %v261 = vor.u32 %v259, %v260
        %v262 = vshll.u32 920167782, %v247
        %v263 = vshrl.u32 1326507024, %v248
        %v264 = vor.u32 %v262, %v263
        %vm265 = vcmp.lt.s32.totalorder %v246, 1
        %vm266 = vcmp.lt.s32.totalorder %v246, 2
        %vm267 = vcmp.lt.s32.totalorder %v246, 3
        %vm268 = vcmp.lt.s32.totalorder %v246, 4
        %v269 = vsel %vm265, %v249, %v252
        %v270 = vsel %vm268, %v258, 2102212464
        %v271 = vsel %vm267, %v255, %v270
        %v272 = vsel %vm266, %v269, %v271
        %v273 = vsel %vm265, %v252, %v255
        %v274 = vsel %vm268, %v261, 920167782
        %v275 = vsel %vm267, %v258, %v274
        %v276 = vsel %vm266, %v273, %v275
        %v277 = vsel %vm265, %v255, %v258
        %v278 = vsel %vm268, %v264, 1326507024
        %v279 = vsel %vm267, %v261, %v278
        %v280 = vsel %vm266, %v277, %v279
        %v281 = vshll.u32 %v241, 8
        %v282 = vmul.u32.u64.compose %v281, %v280
        %v283 = vextract.low.u32 %v282
        %v284 = vextract.high.u32 %v282
        %v285 = vmul.u32.u64.compose %v281, %v276
        %v286 = vextract.low.u32 %v285
        %v287 = vextract.high.u32 %v285
        %v288 = vmul.u32 %v281, %v272
        %v289 = vadd.s32 %v284, %v286
        %vm290 = vc.u32 %v284, %v286
        %v291 = vadd.s32 %v287, 1
        %v292 = vsel %vm290, %v291, %v287
        %v293 = vadd.s32 %v288, %v292
        %v294 = vadd.s32 %v293, 536870912
        %v295 = vshrl.u32 %v294, 30
        %v296 = vshll.u32 %v295, 30
        %v297 = vsub.s32 %v293, %v296
        %vm298 = vcmp.lt.s32.totalorder %v297, 0
        %v299 = vsub.s32 0, %v297
        %v300 = vsel %vm298, %v299, %v297
        %v301 = vclz %v300
        %v302 = vsub.s32 %v301, 2
        %vm303 = vcmp.gt.s32.totalorder 0, %v302
        %v304 = vsel %vm303, 0, %v302
        %v305 = vsub.s32 32, %v304
        %v306 = vshll.u32 %v297, %v304
        %v307 = vshrl.u32 %v289, %v305
        %v308 = vor.u32 %v306, %v307
        %v309 = vsub.s32 4294967266, %v304
        %v310 = vadd.s32 %v309, 127
        %v311 = vshll.u32 %v310, 23
        %v312 = vor.u32 4788187, %v311
        %v313 = vand.u32 2147483647, %v312
        %v315 = vcvt.s32.f32 %v308
        %v316 = vmul.f32 %v315, %v313
        %v317 = vxor.u32 %v316, 2147483648
        %v318 = vsel %vm235, %v317, %v316
        %v319 = vsub.s32 4, %v295
        %v320 = vsel %vm235, %v319, %v295
        %v321 = vsel %vm234, %v217, %v318
        %v322 = vsel %vm234, 0, %v320
        %v323 = vcosq.f32.pop %v321
        %v324 = vsinq.f32.pop %v321
        %vm325 = vweird.f32 %v217
        %v326 = vadd.s32 %v322, 3
        %v327 = vand.u32 %v326, 3
        %vm328 = vcmp.lt.s32.totalorder %v327, 2
        %vm329 = vcmp.eq.s32.totalorder %v327, 0
        %v330 = vxor.u32 %v324, 2147483648
        %v331 = vsel %vm329, %v323, %v330
        %vm332 = vcmp.eq.s32.totalorder %v327, 2
        %v333 = vxor.u32 %v323, 2147483648
        %v334 = vsel %vm332, %v333, %v324
        %v335 = vsel %vm328, %v331, %v334
        %v336 = vsel %vm325, nan, %v335
        %v337 = vand.u32 2147483647, %v218
        %vm338 = vcmp.le.f32.partialorder %v337, 0.7853982
        %vm339 = vcmp.lt.s32.totalorder %v218, 0
        %v340 = vand.u32 %v218, 2139095040
        %v341 = vshrl.u32 %v340, 23
        %v342 = vsub.s32 %v341, 127
        %v343 = vand.u32 2147483647, %v218
        %v344 = vand.u32 %v343, 8388607
        %v345 = vor.u32 %v344, 8388608
        %v346 = vsub.s32 0, %v345
        %v347 = vadd.s32 %v342, 1
        %vm348 = vcmp.gt.s32.totalorder %v347, 0
        %v349 = vsel %vm348, %v347, 0
        %v350 = vshrl.u32 %v349, 5
        %v351 = vand.u32 %v349, 31
        %v352 = vsub.s32 32, %v351
        %v353 = vshrl.u32 683565275, %v352
        %v354 = vshll.u32 683565275, %v351
        %v355 = vshrl.u32 2475754826, %v352
        %v356 = vor.u32 %v354, %v355
        %v357 = vshll.u32 2475754826, %v351
        %v358 = vshrl.u32 2131351028, %v352
        %v359 = vor.u32 %v357, %v358
        %v360 = vshll.u32 2131351028, %v351
        %v361 = vshrl.u32 2102212464, %v352
        %v362 = vor.u32 %v360, %v361
        %v363 = vshll.u32 2102212464, %v351
        %v364 = vshrl.u32 920167782, %v352
        %v365 = vor.u32 %v363, %v364
        %v366 = vshll.u32 920167782, %v351
        %v367 = vshrl.u32 1326507024, %v352
        %v368 = vor.u32 %v366, %v367
        %vm369 = vcmp.lt.s32.totalorder %v350, 1
        %vm370 = vcmp.lt.s32.totalorder %v350, 2
        %vm371 = vcmp.lt.s32.totalorder %v350, 3
        %vm372 = vcmp.lt.s32.totalorder %v350, 4
        %v373 = vsel %vm369, %v353, %v356
        %v374 = vsel %vm372, %v362, 2102212464
        %v375 = vsel %vm371, %v359, %v374
        %v376 = vsel %vm370, %v373, %v375
        %v377 = vsel %vm369, %v356, %v359
        %v378 = vsel %vm372, %v365, 920167782
        %v379 = vsel %vm371, %v362, %v378
        %v380 = vsel %vm370, %v377, %v379
        %v381 = vsel %vm369, %v359, %v362
        %v382 = vsel %vm372, %v368, 1326507024
        %v383 = vsel %vm371, %v365, %v382
        %v384 = vsel %vm370, %v381, %v383
        %v385 = vshll.u32 %v345, 8
        %v386 = vmul.u32.u64.compose %v385, %v384
        %v387 = vextract.low.u32 %v386
        %v388 = vextract.high.u32 %v386
        %v389 = vmul.u32.u64.compose %v385, %v380
        %v390 = vextract.low.u32 %v389
        %v391 = vextract.high.u32 %v389
        %v392 = vmul.u32 %v385, %v376
        %v393 = vadd.s32 %v388, %v390
        %vm394 = vc.u32 %v388, %v390
        %v395 = vadd.s32 %v391, 1
        %v396 = vsel %vm394, %v395, %v391
        %v397 = vadd.s32 %v392, %v396
        %v398 = vadd.s32 %v397, 536870912
        %v399 = vshrl.u32 %v398, 30
        %v400 = vshll.u32 %v399, 30
        %v401 = vsub.s32 %v397, %v400
        %vm402 = vcmp.lt.s32.totalorder %v401, 0
        %v403 = vsub.s32 0, %v401
        %v404 = vsel %vm402, %v403, %v401
        %v405 = vclz %v404
        %v406 = vsub.s32 %v405, 2
        %vm407 = vcmp.gt.s32.totalorder 0, %v406
        %v408 = vsel %vm407, 0, %v406
        %v409 = vsub.s32 32, %v408
        %v410 = vshll.u32 %v401, %v408
        %v411 = vshrl.u32 %v393, %v409
        %v412 = vor.u32 %v410, %v411
        %v413 = vsub.s32 4294967266, %v408
        %v414 = vadd.s32 %v413, 127
        %v415 = vshll.u32 %v414, 23
        %v416 = vor.u32 4788187, %v415
        %v417 = vand.u32 2147483647, %v416
        %v419 = vcvt.s32.f32 %v412
        %v420 = vmul.f32 %v419, %v417
        %v421 = vxor.u32 %v420, 2147483648
        %v422 = vsel %vm339, %v421, %v420
        %v423 = vsub.s32 4, %v399
        %v424 = vsel %vm339, %v423, %v399
        %v425 = vsel %vm338, %v218, %v422
        %v426 = vsel %vm338, 0, %v424
        %v427 = vcosq.f32.pop %v425
        %v428 = vsinq.f32.pop %v425
        %vm429 = vweird.f32 %v218
        %v430 = vadd.s32 %v426, 3
        %v431 = vand.u32 %v430, 3
        %vm432 = vcmp.lt.s32.totalorder %v431, 2
        %vm433 = vcmp.eq.s32.totalorder %v431, 0
        %v434 = vxor.u32 %v428, 2147483648
        %v435 = vsel %vm433, %v427, %v434
        %vm436 = vcmp.eq.s32.totalorder %v431, 2
        %v437 = vxor.u32 %v427, 2147483648
        %v438 = vsel %vm436, %v437, %v428
        %v439 = vsel %vm432, %v435, %v438
        %v440 = vsel %vm429, nan, %v439
        %v441 = vand.u32 2147483647, %v219
        %vm442 = vcmp.le.f32.partialorder %v441, 0.7853982
        %vm443 = vcmp.lt.s32.totalorder %v219, 0
        %v444 = vand.u32 %v219, 2139095040
        %v445 = vshrl.u32 %v444, 23
        %v446 = vsub.s32 %v445, 127
        %v447 = vand.u32 2147483647, %v219
        %v448 = vand.u32 %v447, 8388607
        %v449 = vor.u32 %v448, 8388608
        %v450 = vsub.s32 0, %v449
        %v451 = vadd.s32 %v446, 1
        %vm452 = vcmp.gt.s32.totalorder %v451, 0
        %v453 = vsel %vm452, %v451, 0
        %v454 = vshrl.u32 %v453, 5
        %v455 = vand.u32 %v453, 31
        %v456 = vsub.s32 32, %v455
        %v457 = vshrl.u32 683565275, %v456
        %v458 = vshll.u32 683565275, %v455
        %v459 = vshrl.u32 2475754826, %v456
        %v460 = vor.u32 %v458, %v459
        %v461 = vshll.u32 2475754826, %v455
        %v462 = vshrl.u32 2131351028, %v456
        %v463 = vor.u32 %v461, %v462
        %v464 = vshll.u32 2131351028, %v455
        %v465 = vshrl.u32 2102212464, %v456
        %v466 = vor.u32 %v464, %v465
        %v467 = vshll.u32 2102212464, %v455
        %v468 = vshrl.u32 920167782, %v456
        %v469 = vor.u32 %v467, %v468
        %v470 = vshll.u32 920167782, %v455
        %v471 = vshrl.u32 1326507024, %v456
        %v472 = vor.u32 %v470, %v471
        %vm473 = vcmp.lt.s32.totalorder %v454, 1
        %vm474 = vcmp.lt.s32.totalorder %v454, 2
        %vm475 = vcmp.lt.s32.totalorder %v454, 3
        %vm476 = vcmp.lt.s32.totalorder %v454, 4
        %v477 = vsel %vm473, %v457, %v460
        %v478 = vsel %vm476, %v466, 2102212464
        %v479 = vsel %vm475, %v463, %v478
        %v480 = vsel %vm474, %v477, %v479
        %v481 = vsel %vm473, %v460, %v463
        %v482 = vsel %vm476, %v469, 920167782
        %v483 = vsel %vm475, %v466, %v482
        %v484 = vsel %vm474, %v481, %v483
        %v485 = vsel %vm473, %v463, %v466
        %v486 = vsel %vm476, %v472, 1326507024
        %v487 = vsel %vm475, %v469, %v486
        %v488 = vsel %vm474, %v485, %v487
        %v489 = vshll.u32 %v449, 8
        %v490 = vmul.u32.u64.compose %v489, %v488
        %v491 = vextract.low.u32 %v490
        %v492 = vextract.high.u32 %v490
        %v493 = vmul.u32.u64.compose %v489, %v484
        %v494 = vextract.low.u32 %v493
        %v495 = vextract.high.u32 %v493
        %v496 = vmul.u32 %v489, %v480
        %v497 = vadd.s32 %v492, %v494
        %vm498 = vc.u32 %v492, %v494
        %v499 = vadd.s32 %v495, 1
        %v500 = vsel %vm498, %v499, %v495
        %v501 = vadd.s32 %v496, %v500
        %v502 = vadd.s32 %v501, 536870912
        %v503 = vshrl.u32 %v502, 30
        %v504 = vshll.u32 %v503, 30
        %v505 = vsub.s32 %v501, %v504
        %vm506 = vcmp.lt.s32.totalorder %v505, 0
        %v507 = vsub.s32 0, %v505
        %v508 = vsel %vm506, %v507, %v505
        %v509 = vclz %v508
        %v510 = vsub.s32 %v509, 2
        %vm511 = vcmp.gt.s32.totalorder 0, %v510
        %v512 = vsel %vm511, 0, %v510
        %v513 = vsub.s32 32, %v512
        %v514 = vshll.u32 %v505, %v512
        %v515 = vshrl.u32 %v497, %v513
        %v516 = vor.u32 %v514, %v515
        %v517 = vsub.s32 4294967266, %v512
        %v518 = vadd.s32 %v517, 127
        %v519 = vshll.u32 %v518, 23
        %v520 = vor.u32 4788187, %v519
        %v521 = vand.u32 2147483647, %v520
        %v523 = vcvt.s32.f32 %v516
        %v524 = vmul.f32 %v523, %v521
        %v525 = vxor.u32 %v524, 2147483648
        %v526 = vsel %vm443, %v525, %v524
        %v527 = vsub.s32 4, %v503
        %v528 = vsel %vm443, %v527, %v503
        %v529 = vsel %vm442, %v219, %v526
        %v530 = vsel %vm442, 0, %v528
        %v531 = vcosq.f32.pop %v529
        %v532 = vsinq.f32.pop %v529
        %vm533 = vweird.f32 %v219
        %v534 = vadd.s32 %v530, 3
        %v535 = vand.u32 %v534, 3
        %vm536 = vcmp.lt.s32.totalorder %v535, 2
        %vm537 = vcmp.eq.s32.totalorder %v535, 0
        %v538 = vxor.u32 %v532, 2147483648
        %v539 = vsel %vm537, %v531, %v538
        %vm540 = vcmp.eq.s32.totalorder %v535, 2
        %v541 = vxor.u32 %v531, 2147483648
        %v542 = vsel %vm540, %v541, %v532
        %v543 = vsel %vm536, %v539, %v542
        %v544 = vsel %vm533, nan, %v543
        %v545 = vand.u32 2147483647, %v220
        %vm546 = vcmp.le.f32.partialorder %v545, 0.7853982
        %vm547 = vcmp.lt.s32.totalorder %v220, 0
        %v548 = vand.u32 %v220, 2139095040
        %v549 = vshrl.u32 %v548, 23
        %v550 = vsub.s32 %v549, 127
        %v551 = vand.u32 2147483647, %v220
        %v552 = vand.u32 %v551, 8388607
        %v553 = vor.u32 %v552, 8388608
        %v554 = vsub.s32 0, %v553
        %v555 = vadd.s32 %v550, 1
        %vm556 = vcmp.gt.s32.totalorder %v555, 0
        %v557 = vsel %vm556, %v555, 0
        %v558 = vshrl.u32 %v557, 5
        %v559 = vand.u32 %v557, 31
        %v560 = vsub.s32 32, %v559
        %v561 = vshrl.u32 683565275, %v560
        %v562 = vshll.u32 683565275, %v559
        %v563 = vshrl.u32 2475754826, %v560
        %v564 = vor.u32 %v562, %v563
        %v565 = vshll.u32 2475754826, %v559
        %v566 = vshrl.u32 2131351028, %v560
        %v567 = vor.u32 %v565, %v566
        %v568 = vshll.u32 2131351028, %v559
        %v569 = vshrl.u32 2102212464, %v560
        %v570 = vor.u32 %v568, %v569
        %v571 = vshll.u32 2102212464, %v559
        %v572 = vshrl.u32 920167782, %v560
        %v573 = vor.u32 %v571, %v572
        %v574 = vshll.u32 920167782, %v559
        %v575 = vshrl.u32 1326507024, %v560
        %v576 = vor.u32 %v574, %v575
        %vm577 = vcmp.lt.s32.totalorder %v558, 1
        %vm578 = vcmp.lt.s32.totalorder %v558, 2
        %vm579 = vcmp.lt.s32.totalorder %v558, 3
        %vm580 = vcmp.lt.s32.totalorder %v558, 4
        %v581 = vsel %vm577, %v561, %v564
        %v582 = vsel %vm580, %v570, 2102212464
        %v583 = vsel %vm579, %v567, %v582
        %v584 = vsel %vm578, %v581, %v583
        %v585 = vsel %vm577, %v564, %v567
        %v586 = vsel %vm580, %v573, 920167782
        %v587 = vsel %vm579, %v570, %v586
        %v588 = vsel %vm578, %v585, %v587
        %v589 = vsel %vm577, %v567, %v570
        %v590 = vsel %vm580, %v576, 1326507024
        %v591 = vsel %vm579, %v573, %v590
        %v592 = vsel %vm578, %v589, %v591
        %v593 = vshll.u32 %v553, 8
        %v594 = vmul.u32.u64.compose %v593, %v592
        %v595 = vextract.low.u32 %v594
        %v596 = vextract.high.u32 %v594
        %v597 = vmul.u32.u64.compose %v593, %v588
        %v598 = vextract.low.u32 %v597
        %v599 = vextract.high.u32 %v597
        %v600 = vmul.u32 %v593, %v584
        %v601 = vadd.s32 %v596, %v598
        %vm602 = vc.u32 %v596, %v598
        %v603 = vadd.s32 %v599, 1
        %v604 = vsel %vm602, %v603, %v599
        %v605 = vadd.s32 %v600, %v604
        %v606 = vadd.s32 %v605, 536870912
        %v607 = vshrl.u32 %v606, 30
        %v608 = vshll.u32 %v607, 30
        %v609 = vsub.s32 %v605, %v608
        %vm610 = vcmp.lt.s32.totalorder %v609, 0
        %v611 = vsub.s32 0, %v609
        %v612 = vsel %vm610, %v611, %v609
        %v613 = vclz %v612
        %v614 = vsub.s32 %v613, 2
        %vm615 = vcmp.gt.s32.totalorder 0, %v614
        %v616 = vsel %vm615, 0, %v614
        %v617 = vsub.s32 32, %v616
        %v618 = vshll.u32 %v609, %v616
        %v619 = vshrl.u32 %v601, %v617
        %v620 = vor.u32 %v618, %v619
        %v621 = vsub.s32 4294967266, %v616
        %v622 = vadd.s32 %v621, 127
        %v623 = vshll.u32 %v622, 23
        %v624 = vor.u32 4788187, %v623
        %v625 = vand.u32 2147483647, %v624
        %v627 = vcvt.s32.f32 %v620
        %v628 = vmul.f32 %v627, %v625
        %v629 = vxor.u32 %v628, 2147483648
        %v630 = vsel %vm547, %v629, %v628
        %v631 = vsub.s32 4, %v607
        %v632 = vsel %vm547, %v631, %v607
        %v633 = vsel %vm546, %v220, %v630
        %v634 = vsel %vm546, 0, %v632
        %v635 = vcosq.f32.pop %v633
        %v636 = vsinq.f32.pop %v633
        %vm637 = vweird.f32 %v220
        %v638 = vadd.s32 %v634, 3
        %v639 = vand.u32 %v638, 3
        %vm640 = vcmp.lt.s32.totalorder %v639, 2
        %vm641 = vcmp.eq.s32.totalorder %v639, 0
        %v642 = vxor.u32 %v636, 2147483648
        %v643 = vsel %vm641, %v635, %v642
        %vm644 = vcmp.eq.s32.totalorder %v639, 2
        %v645 = vxor.u32 %v635, 2147483648
        %v646 = vsel %vm644, %v645, %v636
        %v647 = vsel %vm640, %v643, %v646
        %v648 = vsel %vm637, nan, %v647
        %v649 = vand.u32 2147483647, %v221
        %vm650 = vcmp.le.f32.partialorder %v649, 0.7853982
        %vm651 = vcmp.lt.s32.totalorder %v221, 0
        %v652 = vand.u32 %v221, 2139095040
        %v653 = vshrl.u32 %v652, 23
        %v654 = vsub.s32 %v653, 127
        %v655 = vand.u32 2147483647, %v221
        %v656 = vand.u32 %v655, 8388607
        %v657 = vor.u32 %v656, 8388608
        %v658 = vsub.s32 0, %v657
        %v659 = vadd.s32 %v654, 1
        %vm660 = vcmp.gt.s32.totalorder %v659, 0
        %v661 = vsel %vm660, %v659, 0
        %v662 = vshrl.u32 %v661, 5
        %v663 = vand.u32 %v661, 31
        %v664 = vsub.s32 32, %v663
        %v665 = vshrl.u32 683565275, %v664
        %v666 = vshll.u32 683565275, %v663
        %v667 = vshrl.u32 2475754826, %v664
        %v668 = vor.u32 %v666, %v667
        %v669 = vshll.u32 2475754826, %v663
        %v670 = vshrl.u32 2131351028, %v664
        %v671 = vor.u32 %v669, %v670
        %v672 = vshll.u32 2131351028, %v663
        %v673 = vshrl.u32 2102212464, %v664
        %v674 = vor.u32 %v672, %v673
        %v675 = vshll.u32 2102212464, %v663
        %v676 = vshrl.u32 920167782, %v664
        %v677 = vor.u32 %v675, %v676
        %v678 = vshll.u32 920167782, %v663
        %v679 = vshrl.u32 1326507024, %v664
        %v680 = vor.u32 %v678, %v679
        %vm681 = vcmp.lt.s32.totalorder %v662, 1
        %vm682 = vcmp.lt.s32.totalorder %v662, 2
        %vm683 = vcmp.lt.s32.totalorder %v662, 3
        %vm684 = vcmp.lt.s32.totalorder %v662, 4
        %v685 = vsel %vm681, %v665, %v668
        %v686 = vsel %vm684, %v674, 2102212464
        %v687 = vsel %vm683, %v671, %v686
        %v688 = vsel %vm682, %v685, %v687
        %v689 = vsel %vm681, %v668, %v671
        %v690 = vsel %vm684, %v677, 920167782
        %v691 = vsel %vm683, %v674, %v690
        %v692 = vsel %vm682, %v689, %v691
        %v693 = vsel %vm681, %v671, %v674
        %v694 = vsel %vm684, %v680, 1326507024
        %v695 = vsel %vm683, %v677, %v694
        %v696 = vsel %vm682, %v693, %v695
        %v697 = vshll.u32 %v657, 8
        %v698 = vmul.u32.u64.compose %v697, %v696
        %v699 = vextract.low.u32 %v698
        %v700 = vextract.high.u32 %v698
        %v701 = vmul.u32.u64.compose %v697, %v692
        %v702 = vextract.low.u32 %v701
        %v703 = vextract.high.u32 %v701
        %v704 = vmul.u32 %v697, %v688
        %v705 = vadd.s32 %v700, %v702
        %vm706 = vc.u32 %v700, %v702
        %v707 = vadd.s32 %v703, 1
        %v708 = vsel %vm706, %v707, %v703
        %v709 = vadd.s32 %v704, %v708
        %v710 = vadd.s32 %v709, 536870912
        %v711 = vshrl.u32 %v710, 30
        %v712 = vshll.u32 %v711, 30
        %v713 = vsub.s32 %v709, %v712
        %vm714 = vcmp.lt.s32.totalorder %v713, 0
        %v715 = vsub.s32 0, %v713
        %v716 = vsel %vm714, %v715, %v713
        %v717 = vclz %v716
        %v718 = vsub.s32 %v717, 2
        %vm719 = vcmp.gt.s32.totalorder 0, %v718
        %v720 = vsel %vm719, 0, %v718
        %v721 = vsub.s32 32, %v720
        %v722 = vshll.u32 %v713, %v720
        %v723 = vshrl.u32 %v705, %v721
        %v724 = vor.u32 %v722, %v723
        %v725 = vsub.s32 4294967266, %v720
        %v726 = vadd.s32 %v725, 127
        %v727 = vshll.u32 %v726, 23
        %v728 = vor.u32 4788187, %v727
        %v729 = vand.u32 2147483647, %v728
        %v731 = vcvt.s32.f32 %v724
        %v732 = vmul.f32 %v731, %v729
        %v733 = vxor.u32 %v732, 2147483648
        %v734 = vsel %vm651, %v733, %v732
        %v735 = vsub.s32 4, %v711
        %v736 = vsel %vm651, %v735, %v711
        %v737 = vsel %vm650, %v221, %v734
        %v738 = vsel %vm650, 0, %v736
        %v739 = vcosq.f32.pop %v737
        %v740 = vsinq.f32.pop %v737
        %vm741 = vweird.f32 %v221
        %v742 = vadd.s32 %v738, 3
        %v743 = vand.u32 %v742, 3
        %vm744 = vcmp.lt.s32.totalorder %v743, 2
        %vm745 = vcmp.eq.s32.totalorder %v743, 0
        %v746 = vxor.u32 %v740, 2147483648
        %v747 = vsel %vm745, %v739, %v746
        %vm748 = vcmp.eq.s32.totalorder %v743, 2
        %v749 = vxor.u32 %v739, 2147483648
        %v750 = vsel %vm748, %v749, %v740
        %v751 = vsel %vm744, %v747, %v750
        %v752 = vsel %vm741, nan, %v751
        %v753 = vand.u32 2147483647, %v222
        %vm754 = vcmp.le.f32.partialorder %v753, 0.7853982
        %vm755 = vcmp.lt.s32.totalorder %v222, 0
        %v756 = vand.u32 %v222, 2139095040
        %v757 = vshrl.u32 %v756, 23
        %v758 = vsub.s32 %v757, 127
        %v759 = vand.u32 2147483647, %v222
        %v760 = vand.u32 %v759, 8388607
        %v761 = vor.u32 %v760, 8388608
        %v762 = vsub.s32 0, %v761
        %v763 = vadd.s32 %v758, 1
        %vm764 = vcmp.gt.s32.totalorder %v763, 0
        %v765 = vsel %vm764, %v763, 0
        %v766 = vshrl.u32 %v765, 5
        %v767 = vand.u32 %v765, 31
        %v768 = vsub.s32 32, %v767
        %v769 = vshrl.u32 683565275, %v768
        %v770 = vshll.u32 683565275, %v767
        %v771 = vshrl.u32 2475754826, %v768
        %v772 = vor.u32 %v770, %v771
        %v773 = vshll.u32 2475754826, %v767
        %v774 = vshrl.u32 2131351028, %v768
        %v775 = vor.u32 %v773, %v774
        %v776 = vshll.u32 2131351028, %v767
        %v777 = vshrl.u32 2102212464, %v768
        %v778 = vor.u32 %v776, %v777
        %v779 = vshll.u32 2102212464, %v767
        %v780 = vshrl.u32 920167782, %v768
        %v781 = vor.u32 %v779, %v780
        %v782 = vshll.u32 920167782, %v767
        %v783 = vshrl.u32 1326507024, %v768
        %v784 = vor.u32 %v782, %v783
        %vm785 = vcmp.lt.s32.totalorder %v766, 1
        %vm786 = vcmp.lt.s32.totalorder %v766, 2
        %vm787 = vcmp.lt.s32.totalorder %v766, 3
        %vm788 = vcmp.lt.s32.totalorder %v766, 4
        %v789 = vsel %vm785, %v769, %v772
        %v790 = vsel %vm788, %v778, 2102212464
        %v791 = vsel %vm787, %v775, %v790
        %v792 = vsel %vm786, %v789, %v791
        %v793 = vsel %vm785, %v772, %v775
        %v794 = vsel %vm788, %v781, 920167782
        %v795 = vsel %vm787, %v778, %v794
        %v796 = vsel %vm786, %v793, %v795
        %v797 = vsel %vm785, %v775, %v778
        %v798 = vsel %vm788, %v784, 1326507024
        %v799 = vsel %vm787, %v781, %v798
        %v800 = vsel %vm786, %v797, %v799
        %v801 = vshll.u32 %v761, 8
        %v802 = vmul.u32.u64.compose %v801, %v800
        %v803 = vextract.low.u32 %v802
        %v804 = vextract.high.u32 %v802
        %v805 = vmul.u32.u64.compose %v801, %v796
        %v806 = vextract.low.u32 %v805
        %v807 = vextract.high.u32 %v805
        %v808 = vmul.u32 %v801, %v792
        %v809 = vadd.s32 %v804, %v806
        %vm810 = vc.u32 %v804, %v806
        %v811 = vadd.s32 %v807, 1
        %v812 = vsel %vm810, %v811, %v807
        %v813 = vadd.s32 %v808, %v812
        %v814 = vadd.s32 %v813, 536870912
        %v815 = vshrl.u32 %v814, 30
        %v816 = vshll.u32 %v815, 30
        %v817 = vsub.s32 %v813, %v816
        %vm818 = vcmp.lt.s32.totalorder %v817, 0
        %v819 = vsub.s32 0, %v817
        %v820 = vsel %vm818, %v819, %v817
        %v821 = vclz %v820
        %v822 = vsub.s32 %v821, 2
        %vm823 = vcmp.gt.s32.totalorder 0, %v822
        %v824 = vsel %vm823, 0, %v822
        %v825 = vsub.s32 32, %v824
        %v826 = vshll.u32 %v817, %v824
        %v827 = vshrl.u32 %v809, %v825
        %v828 = vor.u32 %v826, %v827
        %v829 = vsub.s32 4294967266, %v824
        %v830 = vadd.s32 %v829, 127
        %v831 = vshll.u32 %v830, 23
        %v832 = vor.u32 4788187, %v831
        %v833 = vand.u32 2147483647, %v832
        %v835 = vcvt.s32.f32 %v828
        %v836 = vmul.f32 %v835, %v833
        %v837 = vxor.u32 %v836, 2147483648
        %v838 = vsel %vm755, %v837, %v836
        %v839 = vsub.s32 4, %v815
        %v840 = vsel %vm755, %v839, %v815
        %v841 = vsel %vm754, %v222, %v838
        %v842 = vsel %vm754, 0, %v840
        %v843 = vcosq.f32.pop %v841
        %v844 = vsinq.f32.pop %v841
        %vm845 = vweird.f32 %v222
        %v846 = vadd.s32 %v842, 3
        %v847 = vand.u32 %v846, 3
        %vm848 = vcmp.lt.s32.totalorder %v847, 2
        %vm849 = vcmp.eq.s32.totalorder %v847, 0
        %v850 = vxor.u32 %v844, 2147483648
        %v851 = vsel %vm849, %v843, %v850
        %vm852 = vcmp.eq.s32.totalorder %v847, 2
        %v853 = vxor.u32 %v843, 2147483648
        %v854 = vsel %vm852, %v853, %v844
        %v855 = vsel %vm848, %v851, %v854
        %v856 = vsel %vm845, nan, %v855
        %v857 = vand.u32 2147483647, %v223
        %vm858 = vcmp.le.f32.partialorder %v857, 0.7853982
        %vm859 = vcmp.lt.s32.totalorder %v223, 0
        %v860 = vand.u32 %v223, 2139095040
        %v861 = vshrl.u32 %v860, 23
        %v862 = vsub.s32 %v861, 127
        %v863 = vand.u32 2147483647, %v223
        %v864 = vand.u32 %v863, 8388607
        %v865 = vor.u32 %v864, 8388608
        %v866 = vsub.s32 0, %v865
        %v867 = vadd.s32 %v862, 1
        %vm868 = vcmp.gt.s32.totalorder %v867, 0
        %v869 = vsel %vm868, %v867, 0
        %v870 = vshrl.u32 %v869, 5
        %v871 = vand.u32 %v869, 31
        %v872 = vsub.s32 32, %v871
        %v873 = vshrl.u32 683565275, %v872
        %v874 = vshll.u32 683565275, %v871
        %v875 = vshrl.u32 2475754826, %v872
        %v876 = vor.u32 %v874, %v875
        %v877 = vshll.u32 2475754826, %v871
        %v878 = vshrl.u32 2131351028, %v872
        %v879 = vor.u32 %v877, %v878
        %v880 = vshll.u32 2131351028, %v871
        %v881 = vshrl.u32 2102212464, %v872
        %v882 = vor.u32 %v880, %v881
        %v883 = vshll.u32 2102212464, %v871
        %v884 = vshrl.u32 920167782, %v872
        %v885 = vor.u32 %v883, %v884
        %v886 = vshll.u32 920167782, %v871
        %v887 = vshrl.u32 1326507024, %v872
        %v888 = vor.u32 %v886, %v887
        %vm889 = vcmp.lt.s32.totalorder %v870, 1
        %vm890 = vcmp.lt.s32.totalorder %v870, 2
        %vm891 = vcmp.lt.s32.totalorder %v870, 3
        %vm892 = vcmp.lt.s32.totalorder %v870, 4
        %v893 = vsel %vm889, %v873, %v876
        %v894 = vsel %vm892, %v882, 2102212464
        %v895 = vsel %vm891, %v879, %v894
        %v896 = vsel %vm890, %v893, %v895
        %v897 = vsel %vm889, %v876, %v879
        %v898 = vsel %vm892, %v885, 920167782
        %v899 = vsel %vm891, %v882, %v898
        %v900 = vsel %vm890, %v897, %v899
        %v901 = vsel %vm889, %v879, %v882
        %v902 = vsel %vm892, %v888, 1326507024
        %v903 = vsel %vm891, %v885, %v902
        %v904 = vsel %vm890, %v901, %v903
        %v905 = vshll.u32 %v865, 8
        %v906 = vmul.u32.u64.compose %v905, %v904
        %v907 = vextract.low.u32 %v906
        %v908 = vextract.high.u32 %v906
        %v909 = vmul.u32.u64.compose %v905, %v900
        %v910 = vextract.low.u32 %v909
        %v911 = vextract.high.u32 %v909
        %v912 = vmul.u32 %v905, %v896
        %v913 = vadd.s32 %v908, %v910
        %vm914 = vc.u32 %v908, %v910
        %v915 = vadd.s32 %v911, 1
        %v916 = vsel %vm914, %v915, %v911
        %v917 = vadd.s32 %v912, %v916
        %v918 = vadd.s32 %v917, 536870912
        %v919 = vshrl.u32 %v918, 30
        %v920 = vshll.u32 %v919, 30
        %v921 = vsub.s32 %v917, %v920
        %vm922 = vcmp.lt.s32.totalorder %v921, 0
        %v923 = vsub.s32 0, %v921
        %v924 = vsel %vm922, %v923, %v921
        %v925 = vclz %v924
        %v926 = vsub.s32 %v925, 2
        %vm927 = vcmp.gt.s32.totalorder 0, %v926
        %v928 = vsel %vm927, 0, %v926
        %v929 = vsub.s32 32, %v928
        %v930 = vshll.u32 %v921, %v928
        %v931 = vshrl.u32 %v913, %v929
        %v932 = vor.u32 %v930, %v931
        %v933 = vsub.s32 4294967266, %v928
        %v934 = vadd.s32 %v933, 127
        %v935 = vshll.u32 %v934, 23
        %v936 = vor.u32 4788187, %v935
        %v937 = vand.u32 2147483647, %v936
        %v939 = vcvt.s32.f32 %v932
        %v940 = vmul.f32 %v939, %v937
        %v941 = vxor.u32 %v940, 2147483648
        %v942 = vsel %vm859, %v941, %v940
        %v943 = vsub.s32 4, %v919
        %v944 = vsel %vm859, %v943, %v919
        %v945 = vsel %vm858, %v223, %v942
        %v946 = vsel %vm858, 0, %v944
        %v947 = vcosq.f32.pop %v945
        %v948 = vsinq.f32.pop %v945
        %vm949 = vweird.f32 %v223
        %v950 = vadd.s32 %v946, 3
        %v951 = vand.u32 %v950, 3
        %vm952 = vcmp.lt.s32.totalorder %v951, 2
        %vm953 = vcmp.eq.s32.totalorder %v951, 0
        %v954 = vxor.u32 %v948, 2147483648
        %v955 = vsel %vm953, %v947, %v954
        %vm956 = vcmp.eq.s32.totalorder %v951, 2
        %v957 = vxor.u32 %v947, 2147483648
        %v958 = vsel %vm956, %v957, %v948
        %v959 = vsel %vm952, %v955, %v958
        %v960 = vsel %vm949, nan, %v959
        %v961 = vand.u32 2147483647, %v224
        %vm962 = vcmp.le.f32.partialorder %v961, 0.7853982
        %vm963 = vcmp.lt.s32.totalorder %v224, 0
        %v964 = vand.u32 %v224, 2139095040
        %v965 = vshrl.u32 %v964, 23
        %v966 = vsub.s32 %v965, 127
        %v967 = vand.u32 2147483647, %v224
        %v968 = vand.u32 %v967, 8388607
        %v969 = vor.u32 %v968, 8388608
        %v970 = vsub.s32 0, %v969
        %v971 = vadd.s32 %v966, 1
        %vm972 = vcmp.gt.s32.totalorder %v971, 0
        %v973 = vsel %vm972, %v971, 0
        %v974 = vshrl.u32 %v973, 5
        %v975 = vand.u32 %v973, 31
        %v976 = vsub.s32 32, %v975
        %v977 = vshrl.u32 683565275, %v976
        %v978 = vshll.u32 683565275, %v975
        %v979 = vshrl.u32 2475754826, %v976
        %v980 = vor.u32 %v978, %v979
        %v981 = vshll.u32 2475754826, %v975
        %v982 = vshrl.u32 2131351028, %v976
        %v983 = vor.u32 %v981, %v982
        %v984 = vshll.u32 2131351028, %v975
        %v985 = vshrl.u32 2102212464, %v976
        %v986 = vor.u32 %v984, %v985
        %v987 = vshll.u32 2102212464, %v975
        %v988 = vshrl.u32 920167782, %v976
        %v989 = vor.u32 %v987, %v988
        %v990 = vshll.u32 920167782, %v975
        %v991 = vshrl.u32 1326507024, %v976
        %v992 = vor.u32 %v990, %v991
        %vm993 = vcmp.lt.s32.totalorder %v974, 1
        %vm994 = vcmp.lt.s32.totalorder %v974, 2
        %vm995 = vcmp.lt.s32.totalorder %v974, 3
        %vm996 = vcmp.lt.s32.totalorder %v974, 4
        %v997 = vsel %vm993, %v977, %v980
        %v998 = vsel %vm996, %v986, 2102212464
        %v999 = vsel %vm995, %v983, %v998
        %v1000 = vsel %vm994, %v997, %v999
        %v1001 = vsel %vm993, %v980, %v983
        %v1002 = vsel %vm996, %v989, 920167782
        %v1003 = vsel %vm995, %v986, %v1002
        %v1004 = vsel %vm994, %v1001, %v1003
        %v1005 = vsel %vm993, %v983, %v986
        %v1006 = vsel %vm996, %v992, 1326507024
        %v1007 = vsel %vm995, %v989, %v1006
        %v1008 = vsel %vm994, %v1005, %v1007
        %v1009 = vshll.u32 %v969, 8
        %v1010 = vmul.u32.u64.compose %v1009, %v1008
        %v1011 = vextract.low.u32 %v1010
        %v1012 = vextract.high.u32 %v1010
        %v1013 = vmul.u32.u64.compose %v1009, %v1004
        %v1014 = vextract.low.u32 %v1013
        %v1015 = vextract.high.u32 %v1013
        %v1016 = vmul.u32 %v1009, %v1000
        %v1017 = vadd.s32 %v1012, %v1014
        %vm1018 = vc.u32 %v1012, %v1014
        %v1019 = vadd.s32 %v1015, 1
        %v1020 = vsel %vm1018, %v1019, %v1015
        %v1021 = vadd.s32 %v1016, %v1020
        %v1022 = vadd.s32 %v1021, 536870912
        %v1023 = vshrl.u32 %v1022, 30
        %v1024 = vshll.u32 %v1023, 30
        %v1025 = vsub.s32 %v1021, %v1024
        %vm1026 = vcmp.lt.s32.totalorder %v1025, 0
        %v1027 = vsub.s32 0, %v1025
        %v1028 = vsel %vm1026, %v1027, %v1025
        %v1029 = vclz %v1028
        %v1030 = vsub.s32 %v1029, 2
        %vm1031 = vcmp.gt.s32.totalorder 0, %v1030
        %v1032 = vsel %vm1031, 0, %v1030
        %v1033 = vsub.s32 32, %v1032
        %v1034 = vshll.u32 %v1025, %v1032
        %v1035 = vshrl.u32 %v1017, %v1033
        %v1036 = vor.u32 %v1034, %v1035
        %v1037 = vsub.s32 4294967266, %v1032
        %v1038 = vadd.s32 %v1037, 127
        %v1039 = vshll.u32 %v1038, 23
        %v1040 = vor.u32 4788187, %v1039
        %v1041 = vand.u32 2147483647, %v1040
        %v1043 = vcvt.s32.f32 %v1036
        %v1044 = vmul.f32 %v1043, %v1041
        %v1045 = vxor.u32 %v1044, 2147483648
        %v1046 = vsel %vm963, %v1045, %v1044
        %v1047 = vsub.s32 4, %v1023
        %v1048 = vsel %vm963, %v1047, %v1023
        %v1049 = vsel %vm962, %v224, %v1046
        %v1050 = vsel %vm962, 0, %v1048
        %v1051 = vcosq.f32.pop %v1049
        %v1052 = vsinq.f32.pop %v1049
        %vm1053 = vweird.f32 %v224
        %v1054 = vadd.s32 %v1050, 3
        %v1055 = vand.u32 %v1054, 3
        %vm1056 = vcmp.lt.s32.totalorder %v1055, 2
        %vm1057 = vcmp.eq.s32.totalorder %v1055, 0
        %v1058 = vxor.u32 %v1052, 2147483648
        %v1059 = vsel %vm1057, %v1051, %v1058
        %vm1060 = vcmp.eq.s32.totalorder %v1055, 2
        %v1061 = vxor.u32 %v1051, 2147483648
        %v1062 = vsel %vm1060, %v1061, %v1052
        %v1063 = vsel %vm1056, %v1059, %v1062
        %v1064 = vsel %vm1053, nan, %v1063
        %v1065 = vand.u32 2147483647, %v225
        %vm1066 = vcmp.le.f32.partialorder %v1065, 0.7853982
        %vm1067 = vcmp.lt.s32.totalorder %v225, 0
        %v1068 = vand.u32 %v225, 2139095040
        %v1069 = vshrl.u32 %v1068, 23
        %v1070 = vsub.s32 %v1069, 127
        %v1071 = vand.u32 2147483647, %v225
        %v1072 = vand.u32 %v1071, 8388607
        %v1073 = vor.u32 %v1072, 8388608
        %v1074 = vsub.s32 0, %v1073
        %v1075 = vadd.s32 %v1070, 1
        %vm1076 = vcmp.gt.s32.totalorder %v1075, 0
        %v1077 = vsel %vm1076, %v1075, 0
        %v1078 = vshrl.u32 %v1077, 5
        %v1079 = vand.u32 %v1077, 31
        %v1080 = vsub.s32 32, %v1079
        %v1081 = vshrl.u32 683565275, %v1080
        %v1082 = vshll.u32 683565275, %v1079
        %v1083 = vshrl.u32 2475754826, %v1080
        %v1084 = vor.u32 %v1082, %v1083
        %v1085 = vshll.u32 2475754826, %v1079
        %v1086 = vshrl.u32 2131351028, %v1080
        %v1087 = vor.u32 %v1085, %v1086
        %v1088 = vshll.u32 2131351028, %v1079
        %v1089 = vshrl.u32 2102212464, %v1080
        %v1090 = vor.u32 %v1088, %v1089
        %v1091 = vshll.u32 2102212464, %v1079
        %v1092 = vshrl.u32 920167782, %v1080
        %v1093 = vor.u32 %v1091, %v1092
        %v1094 = vshll.u32 920167782, %v1079
        %v1095 = vshrl.u32 1326507024, %v1080
        %v1096 = vor.u32 %v1094, %v1095
        %vm1097 = vcmp.lt.s32.totalorder %v1078, 1
        %vm1098 = vcmp.lt.s32.totalorder %v1078, 2
        %vm1099 = vcmp.lt.s32.totalorder %v1078, 3
        %vm1100 = vcmp.lt.s32.totalorder %v1078, 4
        %v1101 = vsel %vm1097, %v1081, %v1084
        %v1102 = vsel %vm1100, %v1090, 2102212464
        %v1103 = vsel %vm1099, %v1087, %v1102
        %v1104 = vsel %vm1098, %v1101, %v1103
        %v1105 = vsel %vm1097, %v1084, %v1087
        %v1106 = vsel %vm1100, %v1093, 920167782
        %v1107 = vsel %vm1099, %v1090, %v1106
        %v1108 = vsel %vm1098, %v1105, %v1107
        %v1109 = vsel %vm1097, %v1087, %v1090
        %v1110 = vsel %vm1100, %v1096, 1326507024
        %v1111 = vsel %vm1099, %v1093, %v1110
        %v1112 = vsel %vm1098, %v1109, %v1111
        %v1113 = vshll.u32 %v1073, 8
        %v1114 = vmul.u32.u64.compose %v1113, %v1112
        %v1115 = vextract.low.u32 %v1114
        %v1116 = vextract.high.u32 %v1114
        %v1117 = vmul.u32.u64.compose %v1113, %v1108
        %v1118 = vextract.low.u32 %v1117
        %v1119 = vextract.high.u32 %v1117
        %v1120 = vmul.u32 %v1113, %v1104
        %v1121 = vadd.s32 %v1116, %v1118
        %vm1122 = vc.u32 %v1116, %v1118
        %v1123 = vadd.s32 %v1119, 1
        %v1124 = vsel %vm1122, %v1123, %v1119
        %v1125 = vadd.s32 %v1120, %v1124
        %v1126 = vadd.s32 %v1125, 536870912
        %v1127 = vshrl.u32 %v1126, 30
        %v1128 = vshll.u32 %v1127, 30
        %v1129 = vsub.s32 %v1125, %v1128
        %vm1130 = vcmp.lt.s32.totalorder %v1129, 0
        %v1131 = vsub.s32 0, %v1129
        %v1132 = vsel %vm1130, %v1131, %v1129
        %v1133 = vclz %v1132
        %v1134 = vsub.s32 %v1133, 2
        %vm1135 = vcmp.gt.s32.totalorder 0, %v1134
        %v1136 = vsel %vm1135, 0, %v1134
        %v1137 = vsub.s32 32, %v1136
        %v1138 = vshll.u32 %v1129, %v1136
        %v1139 = vshrl.u32 %v1121, %v1137
        %v1140 = vor.u32 %v1138, %v1139
        %v1141 = vsub.s32 4294967266, %v1136
        %v1142 = vadd.s32 %v1141, 127
        %v1143 = vshll.u32 %v1142, 23
        %v1144 = vor.u32 4788187, %v1143
        %v1145 = vand.u32 2147483647, %v1144
        %v1147 = vcvt.s32.f32 %v1140
        %v1148 = vmul.f32 %v1147, %v1145
        %v1149 = vxor.u32 %v1148, 2147483648
        %v1150 = vsel %vm1067, %v1149, %v1148
        %v1151 = vsub.s32 4, %v1127
        %v1152 = vsel %vm1067, %v1151, %v1127
        %v1153 = vsel %vm1066, %v225, %v1150
        %v1154 = vsel %vm1066, 0, %v1152
        %v1155 = vcosq.f32.pop %v1153
        %v1156 = vsinq.f32.pop %v1153
        %vm1157 = vweird.f32 %v225
        %v1158 = vadd.s32 %v1154, 3
        %v1159 = vand.u32 %v1158, 3
        %vm1160 = vcmp.lt.s32.totalorder %v1159, 2
        %vm1161 = vcmp.eq.s32.totalorder %v1159, 0
        %v1162 = vxor.u32 %v1156, 2147483648
        %v1163 = vsel %vm1161, %v1155, %v1162
        %vm1164 = vcmp.eq.s32.totalorder %v1159, 2
        %v1165 = vxor.u32 %v1155, 2147483648
        %v1166 = vsel %vm1164, %v1165, %v1156
        %v1167 = vsel %vm1160, %v1163, %v1166
        %v1168 = vsel %vm1157, nan, %v1167
        %v1169 = vand.u32 2147483647, %v226
        %vm1170 = vcmp.le.f32.partialorder %v1169, 0.7853982
        %vm1171 = vcmp.lt.s32.totalorder %v226, 0
        %v1172 = vand.u32 %v226, 2139095040
        %v1173 = vshrl.u32 %v1172, 23
        %v1174 = vsub.s32 %v1173, 127
        %v1175 = vand.u32 2147483647, %v226
        %v1176 = vand.u32 %v1175, 8388607
        %v1177 = vor.u32 %v1176, 8388608
        %v1178 = vsub.s32 0, %v1177
        %v1179 = vadd.s32 %v1174, 1
        %vm1180 = vcmp.gt.s32.totalorder %v1179, 0
        %v1181 = vsel %vm1180, %v1179, 0
        %v1182 = vshrl.u32 %v1181, 5
        %v1183 = vand.u32 %v1181, 31
        %v1184 = vsub.s32 32, %v1183
        %v1185 = vshrl.u32 683565275, %v1184
        %v1186 = vshll.u32 683565275, %v1183
        %v1187 = vshrl.u32 2475754826, %v1184
        %v1188 = vor.u32 %v1186, %v1187
        %v1189 = vshll.u32 2475754826, %v1183
        %v1190 = vshrl.u32 2131351028, %v1184
        %v1191 = vor.u32 %v1189, %v1190
        %v1192 = vshll.u32 2131351028, %v1183
        %v1193 = vshrl.u32 2102212464, %v1184
        %v1194 = vor.u32 %v1192, %v1193
        %v1195 = vshll.u32 2102212464, %v1183
        %v1196 = vshrl.u32 920167782, %v1184
        %v1197 = vor.u32 %v1195, %v1196
        %v1198 = vshll.u32 920167782, %v1183
        %v1199 = vshrl.u32 1326507024, %v1184
        %v1200 = vor.u32 %v1198, %v1199
        %vm1201 = vcmp.lt.s32.totalorder %v1182, 1
        %vm1202 = vcmp.lt.s32.totalorder %v1182, 2
        %vm1203 = vcmp.lt.s32.totalorder %v1182, 3
        %vm1204 = vcmp.lt.s32.totalorder %v1182, 4
        %v1205 = vsel %vm1201, %v1185, %v1188
        %v1206 = vsel %vm1204, %v1194, 2102212464
        %v1207 = vsel %vm1203, %v1191, %v1206
        %v1208 = vsel %vm1202, %v1205, %v1207
        %v1209 = vsel %vm1201, %v1188, %v1191
        %v1210 = vsel %vm1204, %v1197, 920167782
        %v1211 = vsel %vm1203, %v1194, %v1210
        %v1212 = vsel %vm1202, %v1209, %v1211
        %v1213 = vsel %vm1201, %v1191, %v1194
        %v1214 = vsel %vm1204, %v1200, 1326507024
        %v1215 = vsel %vm1203, %v1197, %v1214
        %v1216 = vsel %vm1202, %v1213, %v1215
        %v1217 = vshll.u32 %v1177, 8
        %v1218 = vmul.u32.u64.compose %v1217, %v1216
        %v1219 = vextract.low.u32 %v1218
        %v1220 = vextract.high.u32 %v1218
        %v1221 = vmul.u32.u64.compose %v1217, %v1212
        %v1222 = vextract.low.u32 %v1221
        %v1223 = vextract.high.u32 %v1221
        %v1224 = vmul.u32 %v1217, %v1208
        %v1225 = vadd.s32 %v1220, %v1222
        %vm1226 = vc.u32 %v1220, %v1222
        %v1227 = vadd.s32 %v1223, 1
        %v1228 = vsel %vm1226, %v1227, %v1223
        %v1229 = vadd.s32 %v1224, %v1228
        %v1230 = vadd.s32 %v1229, 536870912
        %v1231 = vshrl.u32 %v1230, 30
        %v1232 = vshll.u32 %v1231, 30
        %v1233 = vsub.s32 %v1229, %v1232
        %vm1234 = vcmp.lt.s32.totalorder %v1233, 0
        %v1235 = vsub.s32 0, %v1233
        %v1236 = vsel %vm1234, %v1235, %v1233
        %v1237 = vclz %v1236
        %v1238 = vsub.s32 %v1237, 2
        %vm1239 = vcmp.gt.s32.totalorder 0, %v1238
        %v1240 = vsel %vm1239, 0, %v1238
        %v1241 = vsub.s32 32, %v1240
        %v1242 = vshll.u32 %v1233, %v1240
        %v1243 = vshrl.u32 %v1225, %v1241
        %v1244 = vor.u32 %v1242, %v1243
        %v1245 = vsub.s32 4294967266, %v1240
        %v1246 = vadd.s32 %v1245, 127
        %v1247 = vshll.u32 %v1246, 23
        %v1248 = vor.u32 4788187, %v1247
        %v1249 = vand.u32 2147483647, %v1248
        %v1251 = vcvt.s32.f32 %v1244
        %v1252 = vmul.f32 %v1251, %v1249
        %v1253 = vxor.u32 %v1252, 2147483648
        %v1254 = vsel %vm1171, %v1253, %v1252
        %v1255 = vsub.s32 4, %v1231
        %v1256 = vsel %vm1171, %v1255, %v1231
        %v1257 = vsel %vm1170, %v226, %v1254
        %v1258 = vsel %vm1170, 0, %v1256
        %v1259 = vcosq.f32.pop %v1257
        %v1260 = vsinq.f32.pop %v1257
        %vm1261 = vweird.f32 %v226
        %v1262 = vadd.s32 %v1258, 3
        %v1263 = vand.u32 %v1262, 3
        %vm1264 = vcmp.lt.s32.totalorder %v1263, 2
        %vm1265 = vcmp.eq.s32.totalorder %v1263, 0
        %v1266 = vxor.u32 %v1260, 2147483648
        %v1267 = vsel %vm1265, %v1259, %v1266
        %vm1268 = vcmp.eq.s32.totalorder %v1263, 2
        %v1269 = vxor.u32 %v1259, 2147483648
        %v1270 = vsel %vm1268, %v1269, %v1260
        %v1271 = vsel %vm1264, %v1267, %v1270
        %v1272 = vsel %vm1261, nan, %v1271
        %v1273 = vand.u32 2147483647, %v227
        %vm1274 = vcmp.le.f32.partialorder %v1273, 0.7853982
        %vm1275 = vcmp.lt.s32.totalorder %v227, 0
        %v1276 = vand.u32 %v227, 2139095040
        %v1277 = vshrl.u32 %v1276, 23
        %v1278 = vsub.s32 %v1277, 127
        %v1279 = vand.u32 2147483647, %v227
        %v1280 = vand.u32 %v1279, 8388607
        %v1281 = vor.u32 %v1280, 8388608
        %v1282 = vsub.s32 0, %v1281
        %v1283 = vadd.s32 %v1278, 1
        %vm1284 = vcmp.gt.s32.totalorder %v1283, 0
        %v1285 = vsel %vm1284, %v1283, 0
        %v1286 = vshrl.u32 %v1285, 5
        %v1287 = vand.u32 %v1285, 31
        %v1288 = vsub.s32 32, %v1287
        %v1289 = vshrl.u32 683565275, %v1288
        %v1290 = vshll.u32 683565275, %v1287
        %v1291 = vshrl.u32 2475754826, %v1288
        %v1292 = vor.u32 %v1290, %v1291
        %v1293 = vshll.u32 2475754826, %v1287
        %v1294 = vshrl.u32 2131351028, %v1288
        %v1295 = vor.u32 %v1293, %v1294
        %v1296 = vshll.u32 2131351028, %v1287
        %v1297 = vshrl.u32 2102212464, %v1288
        %v1298 = vor.u32 %v1296, %v1297
        %v1299 = vshll.u32 2102212464, %v1287
        %v1300 = vshrl.u32 920167782, %v1288
        %v1301 = vor.u32 %v1299, %v1300
        %v1302 = vshll.u32 920167782, %v1287
        %v1303 = vshrl.u32 1326507024, %v1288
        %v1304 = vor.u32 %v1302, %v1303
        %vm1305 = vcmp.lt.s32.totalorder %v1286, 1
        %vm1306 = vcmp.lt.s32.totalorder %v1286, 2
        %vm1307 = vcmp.lt.s32.totalorder %v1286, 3
        %vm1308 = vcmp.lt.s32.totalorder %v1286, 4
        %v1309 = vsel %vm1305, %v1289, %v1292
        %v1310 = vsel %vm1308, %v1298, 2102212464
        %v1311 = vsel %vm1307, %v1295, %v1310
        %v1312 = vsel %vm1306, %v1309, %v1311
        %v1313 = vsel %vm1305, %v1292, %v1295
        %v1314 = vsel %vm1308, %v1301, 920167782
        %v1315 = vsel %vm1307, %v1298, %v1314
        %v1316 = vsel %vm1306, %v1313, %v1315
        %v1317 = vsel %vm1305, %v1295, %v1298
        %v1318 = vsel %vm1308, %v1304, 1326507024
        %v1319 = vsel %vm1307, %v1301, %v1318
        %v1320 = vsel %vm1306, %v1317, %v1319
        %v1321 = vshll.u32 %v1281, 8
        %v1322 = vmul.u32.u64.compose %v1321, %v1320
        %v1323 = vextract.low.u32 %v1322
        %v1324 = vextract.high.u32 %v1322
        %v1325 = vmul.u32.u64.compose %v1321, %v1316
        %v1326 = vextract.low.u32 %v1325
        %v1327 = vextract.high.u32 %v1325
        %v1328 = vmul.u32 %v1321, %v1312
        %v1329 = vadd.s32 %v1324, %v1326
        %vm1330 = vc.u32 %v1324, %v1326
        %v1331 = vadd.s32 %v1327, 1
        %v1332 = vsel %vm1330, %v1331, %v1327
        %v1333 = vadd.s32 %v1328, %v1332
        %v1334 = vadd.s32 %v1333, 536870912
        %v1335 = vshrl.u32 %v1334, 30
        %v1336 = vshll.u32 %v1335, 30
        %v1337 = vsub.s32 %v1333, %v1336
        %vm1338 = vcmp.lt.s32.totalorder %v1337, 0
        %v1339 = vsub.s32 0, %v1337
        %v1340 = vsel %vm1338, %v1339, %v1337
        %v1341 = vclz %v1340
        %v1342 = vsub.s32 %v1341, 2
        %vm1343 = vcmp.gt.s32.totalorder 0, %v1342
        %v1344 = vsel %vm1343, 0, %v1342
        %v1345 = vsub.s32 32, %v1344
        %v1346 = vshll.u32 %v1337, %v1344
        %v1347 = vshrl.u32 %v1329, %v1345
        %v1348 = vor.u32 %v1346, %v1347
        %v1349 = vsub.s32 4294967266, %v1344
        %v1350 = vadd.s32 %v1349, 127
        %v1351 = vshll.u32 %v1350, 23
        %v1352 = vor.u32 4788187, %v1351
        %v1353 = vand.u32 2147483647, %v1352
        %v1355 = vcvt.s32.f32 %v1348
        %v1356 = vmul.f32 %v1355, %v1353
        %v1357 = vxor.u32 %v1356, 2147483648
        %v1358 = vsel %vm1275, %v1357, %v1356
        %v1359 = vsub.s32 4, %v1335
        %v1360 = vsel %vm1275, %v1359, %v1335
        %v1361 = vsel %vm1274, %v227, %v1358
        %v1362 = vsel %vm1274, 0, %v1360
        %v1363 = vcosq.f32.pop %v1361
        %v1364 = vsinq.f32.pop %v1361
        %vm1365 = vweird.f32 %v227
        %v1366 = vadd.s32 %v1362, 3
        %v1367 = vand.u32 %v1366, 3
        %vm1368 = vcmp.lt.s32.totalorder %v1367, 2
        %vm1369 = vcmp.eq.s32.totalorder %v1367, 0
        %v1370 = vxor.u32 %v1364, 2147483648
        %v1371 = vsel %vm1369, %v1363, %v1370
        %vm1372 = vcmp.eq.s32.totalorder %v1367, 2
        %v1373 = vxor.u32 %v1363, 2147483648
        %v1374 = vsel %vm1372, %v1373, %v1364
        %v1375 = vsel %vm1368, %v1371, %v1374
        %v1376 = vsel %vm1365, nan, %v1375
        %v1377 = vand.u32 2147483647, %v228
        %vm1378 = vcmp.le.f32.partialorder %v1377, 0.7853982
        %vm1379 = vcmp.lt.s32.totalorder %v228, 0
        %v1380 = vand.u32 %v228, 2139095040
        %v1381 = vshrl.u32 %v1380, 23
        %v1382 = vsub.s32 %v1381, 127
        %v1383 = vand.u32 2147483647, %v228
        %v1384 = vand.u32 %v1383, 8388607
        %v1385 = vor.u32 %v1384, 8388608
        %v1386 = vsub.s32 0, %v1385
        %v1387 = vadd.s32 %v1382, 1
        %vm1388 = vcmp.gt.s32.totalorder %v1387, 0
        %v1389 = vsel %vm1388, %v1387, 0
        %v1390 = vshrl.u32 %v1389, 5
        %v1391 = vand.u32 %v1389, 31
        %v1392 = vsub.s32 32, %v1391
        %v1393 = vshrl.u32 683565275, %v1392
        %v1394 = vshll.u32 683565275, %v1391
        %v1395 = vshrl.u32 2475754826, %v1392
        %v1396 = vor.u32 %v1394, %v1395
        %v1397 = vshll.u32 2475754826, %v1391
        %v1398 = vshrl.u32 2131351028, %v1392
        %v1399 = vor.u32 %v1397, %v1398
        %v1400 = vshll.u32 2131351028, %v1391
        %v1401 = vshrl.u32 2102212464, %v1392
        %v1402 = vor.u32 %v1400, %v1401
        %v1403 = vshll.u32 2102212464, %v1391
        %v1404 = vshrl.u32 920167782, %v1392
        %v1405 = vor.u32 %v1403, %v1404
        %v1406 = vshll.u32 920167782, %v1391
        %v1407 = vshrl.u32 1326507024, %v1392
        %v1408 = vor.u32 %v1406, %v1407
        %vm1409 = vcmp.lt.s32.totalorder %v1390, 1
        %vm1410 = vcmp.lt.s32.totalorder %v1390, 2
        %vm1411 = vcmp.lt.s32.totalorder %v1390, 3
        %vm1412 = vcmp.lt.s32.totalorder %v1390, 4
        %v1413 = vsel %vm1409, %v1393, %v1396
        %v1414 = vsel %vm1412, %v1402, 2102212464
        %v1415 = vsel %vm1411, %v1399, %v1414
        %v1416 = vsel %vm1410, %v1413, %v1415
        %v1417 = vsel %vm1409, %v1396, %v1399
        %v1418 = vsel %vm1412, %v1405, 920167782
        %v1419 = vsel %vm1411, %v1402, %v1418
        %v1420 = vsel %vm1410, %v1417, %v1419
        %v1421 = vsel %vm1409, %v1399, %v1402
        %v1422 = vsel %vm1412, %v1408, 1326507024
        %v1423 = vsel %vm1411, %v1405, %v1422
        %v1424 = vsel %vm1410, %v1421, %v1423
        %v1425 = vshll.u32 %v1385, 8
        %v1426 = vmul.u32.u64.compose %v1425, %v1424
        %v1427 = vextract.low.u32 %v1426
        %v1428 = vextract.high.u32 %v1426
        %v1429 = vmul.u32.u64.compose %v1425, %v1420
        %v1430 = vextract.low.u32 %v1429
        %v1431 = vextract.high.u32 %v1429
        %v1432 = vmul.u32 %v1425, %v1416
        %v1433 = vadd.s32 %v1428, %v1430
        %vm1434 = vc.u32 %v1428, %v1430
        %v1435 = vadd.s32 %v1431, 1
        %v1436 = vsel %vm1434, %v1435, %v1431
        %v1437 = vadd.s32 %v1432, %v1436
        %v1438 = vadd.s32 %v1437, 536870912
        %v1439 = vshrl.u32 %v1438, 30
        %v1440 = vshll.u32 %v1439, 30
        %v1441 = vsub.s32 %v1437, %v1440
        %vm1442 = vcmp.lt.s32.totalorder %v1441, 0
        %v1443 = vsub.s32 0, %v1441
        %v1444 = vsel %vm1442, %v1443, %v1441
        %v1445 = vclz %v1444
        %v1446 = vsub.s32 %v1445, 2
        %vm1447 = vcmp.gt.s32.totalorder 0, %v1446
        %v1448 = vsel %vm1447, 0, %v1446
        %v1449 = vsub.s32 32, %v1448
        %v1450 = vshll.u32 %v1441, %v1448
        %v1451 = vshrl.u32 %v1433, %v1449
        %v1452 = vor.u32 %v1450, %v1451
        %v1453 = vsub.s32 4294967266, %v1448
        %v1454 = vadd.s32 %v1453, 127
        %v1455 = vshll.u32 %v1454, 23
        %v1456 = vor.u32 4788187, %v1455
        %v1457 = vand.u32 2147483647, %v1456
        %v1459 = vcvt.s32.f32 %v1452
        %v1460 = vmul.f32 %v1459, %v1457
        %v1461 = vxor.u32 %v1460, 2147483648
        %v1462 = vsel %vm1379, %v1461, %v1460
        %v1463 = vsub.s32 4, %v1439
        %v1464 = vsel %vm1379, %v1463, %v1439
        %v1465 = vsel %vm1378, %v228, %v1462
        %v1466 = vsel %vm1378, 0, %v1464
        %v1467 = vcosq.f32.pop %v1465
        %v1468 = vsinq.f32.pop %v1465
        %vm1469 = vweird.f32 %v228
        %v1470 = vadd.s32 %v1466, 3
        %v1471 = vand.u32 %v1470, 3
        %vm1472 = vcmp.lt.s32.totalorder %v1471, 2
        %vm1473 = vcmp.eq.s32.totalorder %v1471, 0
        %v1474 = vxor.u32 %v1468, 2147483648
        %v1475 = vsel %vm1473, %v1467, %v1474
        %vm1476 = vcmp.eq.s32.totalorder %v1471, 2
        %v1477 = vxor.u32 %v1467, 2147483648
        %v1478 = vsel %vm1476, %v1477, %v1468
        %v1479 = vsel %vm1472, %v1475, %v1478
        %v1480 = vsel %vm1469, nan, %v1479
        %v1481 = vand.u32 2147483647, %v229
        %vm1482 = vcmp.le.f32.partialorder %v1481, 0.7853982
        %vm1483 = vcmp.lt.s32.totalorder %v229, 0
        %v1484 = vand.u32 %v229, 2139095040
        %v1485 = vshrl.u32 %v1484, 23
        %v1486 = vsub.s32 %v1485, 127
        %v1487 = vand.u32 2147483647, %v229
        %v1488 = vand.u32 %v1487, 8388607
        %v1489 = vor.u32 %v1488, 8388608
        %v1490 = vsub.s32 0, %v1489
        %v1491 = vadd.s32 %v1486, 1
        %vm1492 = vcmp.gt.s32.totalorder %v1491, 0
        %v1493 = vsel %vm1492, %v1491, 0
        %v1494 = vshrl.u32 %v1493, 5
        %v1495 = vand.u32 %v1493, 31
        %v1496 = vsub.s32 32, %v1495
        %v1497 = vshrl.u32 683565275, %v1496
        %v1498 = vshll.u32 683565275, %v1495
        %v1499 = vshrl.u32 2475754826, %v1496
        %v1500 = vor.u32 %v1498, %v1499
        %v1501 = vshll.u32 2475754826, %v1495
        %v1502 = vshrl.u32 2131351028, %v1496
        %v1503 = vor.u32 %v1501, %v1502
        %v1504 = vshll.u32 2131351028, %v1495
        %v1505 = vshrl.u32 2102212464, %v1496
        %v1506 = vor.u32 %v1504, %v1505
        %v1507 = vshll.u32 2102212464, %v1495
        %v1508 = vshrl.u32 920167782, %v1496
        %v1509 = vor.u32 %v1507, %v1508
        %v1510 = vshll.u32 920167782, %v1495
        %v1511 = vshrl.u32 1326507024, %v1496
        %v1512 = vor.u32 %v1510, %v1511
        %vm1513 = vcmp.lt.s32.totalorder %v1494, 1
        %vm1514 = vcmp.lt.s32.totalorder %v1494, 2
        %vm1515 = vcmp.lt.s32.totalorder %v1494, 3
        %vm1516 = vcmp.lt.s32.totalorder %v1494, 4
        %v1517 = vsel %vm1513, %v1497, %v1500
        %v1518 = vsel %vm1516, %v1506, 2102212464
        %v1519 = vsel %vm1515, %v1503, %v1518
        %v1520 = vsel %vm1514, %v1517, %v1519
        %v1521 = vsel %vm1513, %v1500, %v1503
        %v1522 = vsel %vm1516, %v1509, 920167782
        %v1523 = vsel %vm1515, %v1506, %v1522
        %v1524 = vsel %vm1514, %v1521, %v1523
        %v1525 = vsel %vm1513, %v1503, %v1506
        %v1526 = vsel %vm1516, %v1512, 1326507024
        %v1527 = vsel %vm1515, %v1509, %v1526
        %v1528 = vsel %vm1514, %v1525, %v1527
        %v1529 = vshll.u32 %v1489, 8
        %v1530 = vmul.u32.u64.compose %v1529, %v1528
        %v1531 = vextract.low.u32 %v1530
        %v1532 = vextract.high.u32 %v1530
        %v1533 = vmul.u32.u64.compose %v1529, %v1524
        %v1534 = vextract.low.u32 %v1533
        %v1535 = vextract.high.u32 %v1533
        %v1536 = vmul.u32 %v1529, %v1520
        %v1537 = vadd.s32 %v1532, %v1534
        %vm1538 = vc.u32 %v1532, %v1534
        %v1539 = vadd.s32 %v1535, 1
        %v1540 = vsel %vm1538, %v1539, %v1535
        %v1541 = vadd.s32 %v1536, %v1540
        %v1542 = vadd.s32 %v1541, 536870912
        %v1543 = vshrl.u32 %v1542, 30
        %v1544 = vshll.u32 %v1543, 30
        %v1545 = vsub.s32 %v1541, %v1544
        %vm1546 = vcmp.lt.s32.totalorder %v1545, 0
        %v1547 = vsub.s32 0, %v1545
        %v1548 = vsel %vm1546, %v1547, %v1545
        %v1549 = vclz %v1548
        %v1550 = vsub.s32 %v1549, 2
        %vm1551 = vcmp.gt.s32.totalorder 0, %v1550
        %v1552 = vsel %vm1551, 0, %v1550
        %v1553 = vsub.s32 32, %v1552
        %v1554 = vshll.u32 %v1545, %v1552
        %v1555 = vshrl.u32 %v1537, %v1553
        %v1556 = vor.u32 %v1554, %v1555
        %v1557 = vsub.s32 4294967266, %v1552
        %v1558 = vadd.s32 %v1557, 127
        %v1559 = vshll.u32 %v1558, 23
        %v1560 = vor.u32 4788187, %v1559
        %v1561 = vand.u32 2147483647, %v1560
        %v1563 = vcvt.s32.f32 %v1556
        %v1564 = vmul.f32 %v1563, %v1561
        %v1565 = vxor.u32 %v1564, 2147483648
        %v1566 = vsel %vm1483, %v1565, %v1564
        %v1567 = vsub.s32 4, %v1543
        %v1568 = vsel %vm1483, %v1567, %v1543
        %v1569 = vsel %vm1482, %v229, %v1566
        %v1570 = vsel %vm1482, 0, %v1568
        %v1571 = vcosq.f32.pop %v1569
        %v1572 = vsinq.f32.pop %v1569
        %vm1573 = vweird.f32 %v229
        %v1574 = vadd.s32 %v1570, 3
        %v1575 = vand.u32 %v1574, 3
        %vm1576 = vcmp.lt.s32.totalorder %v1575, 2
        %vm1577 = vcmp.eq.s32.totalorder %v1575, 0
        %v1578 = vxor.u32 %v1572, 2147483648
        %v1579 = vsel %vm1577, %v1571, %v1578
        %vm1580 = vcmp.eq.s32.totalorder %v1575, 2
        %v1581 = vxor.u32 %v1571, 2147483648
        %v1582 = vsel %vm1580, %v1581, %v1572
        %v1583 = vsel %vm1576, %v1579, %v1582
        %v1584 = vsel %vm1573, nan, %v1583
        %v1585 = vand.u32 2147483647, %v230
        %vm1586 = vcmp.le.f32.partialorder %v1585, 0.7853982
        %vm1587 = vcmp.lt.s32.totalorder %v230, 0
        %v1588 = vand.u32 %v230, 2139095040
        %v1589 = vshrl.u32 %v1588, 23
        %v1590 = vsub.s32 %v1589, 127
        %v1591 = vand.u32 2147483647, %v230
        %v1592 = vand.u32 %v1591, 8388607
        %v1593 = vor.u32 %v1592, 8388608
        %v1594 = vsub.s32 0, %v1593
        %v1595 = vadd.s32 %v1590, 1
        %vm1596 = vcmp.gt.s32.totalorder %v1595, 0
        %v1597 = vsel %vm1596, %v1595, 0
        %v1598 = vshrl.u32 %v1597, 5
        %v1599 = vand.u32 %v1597, 31
        %v1600 = vsub.s32 32, %v1599
        %v1601 = vshrl.u32 683565275, %v1600
        %v1602 = vshll.u32 683565275, %v1599
        %v1603 = vshrl.u32 2475754826, %v1600
        %v1604 = vor.u32 %v1602, %v1603
        %v1605 = vshll.u32 2475754826, %v1599
        %v1606 = vshrl.u32 2131351028, %v1600
        %v1607 = vor.u32 %v1605, %v1606
        %v1608 = vshll.u32 2131351028, %v1599
        %v1609 = vshrl.u32 2102212464, %v1600
        %v1610 = vor.u32 %v1608, %v1609
        %v1611 = vshll.u32 2102212464, %v1599
        %v1612 = vshrl.u32 920167782, %v1600
        %v1613 = vor.u32 %v1611, %v1612
        %v1614 = vshll.u32 920167782, %v1599
        %v1615 = vshrl.u32 1326507024, %v1600
        %v1616 = vor.u32 %v1614, %v1615
        %vm1617 = vcmp.lt.s32.totalorder %v1598, 1
        %vm1618 = vcmp.lt.s32.totalorder %v1598, 2
        %vm1619 = vcmp.lt.s32.totalorder %v1598, 3
        %vm1620 = vcmp.lt.s32.totalorder %v1598, 4
        %v1621 = vsel %vm1617, %v1601, %v1604
        %v1622 = vsel %vm1620, %v1610, 2102212464
        %v1623 = vsel %vm1619, %v1607, %v1622
        %v1624 = vsel %vm1618, %v1621, %v1623
        %v1625 = vsel %vm1617, %v1604, %v1607
        %v1626 = vsel %vm1620, %v1613, 920167782
        %v1627 = vsel %vm1619, %v1610, %v1626
        %v1628 = vsel %vm1618, %v1625, %v1627
        %v1629 = vsel %vm1617, %v1607, %v1610
        %v1630 = vsel %vm1620, %v1616, 1326507024
        %v1631 = vsel %vm1619, %v1613, %v1630
        %v1632 = vsel %vm1618, %v1629, %v1631
        %v1633 = vshll.u32 %v1593, 8
        %v1634 = vmul.u32.u64.compose %v1633, %v1632
        %v1635 = vextract.low.u32 %v1634
        %v1636 = vextract.high.u32 %v1634
        %v1637 = vmul.u32.u64.compose %v1633, %v1628
        %v1638 = vextract.low.u32 %v1637
        %v1639 = vextract.high.u32 %v1637
        %v1640 = vmul.u32 %v1633, %v1624
        %v1641 = vadd.s32 %v1636, %v1638
        %vm1642 = vc.u32 %v1636, %v1638
        %v1643 = vadd.s32 %v1639, 1
        %v1644 = vsel %vm1642, %v1643, %v1639
        %v1645 = vadd.s32 %v1640, %v1644
        %v1646 = vadd.s32 %v1645, 536870912
        %v1647 = vshrl.u32 %v1646, 30
        %v1648 = vshll.u32 %v1647, 30
        %v1649 = vsub.s32 %v1645, %v1648
        %vm1650 = vcmp.lt.s32.totalorder %v1649, 0
        %v1651 = vsub.s32 0, %v1649
        %v1652 = vsel %vm1650, %v1651, %v1649
        %v1653 = vclz %v1652
        %v1654 = vsub.s32 %v1653, 2
        %vm1655 = vcmp.gt.s32.totalorder 0, %v1654
        %v1656 = vsel %vm1655, 0, %v1654
        %v1657 = vsub.s32 32, %v1656
        %v1658 = vshll.u32 %v1649, %v1656
        %v1659 = vshrl.u32 %v1641, %v1657
        %v1660 = vor.u32 %v1658, %v1659
        %v1661 = vsub.s32 4294967266, %v1656
        %v1662 = vadd.s32 %v1661, 127
        %v1663 = vshll.u32 %v1662, 23
        %v1664 = vor.u32 4788187, %v1663
        %v1665 = vand.u32 2147483647, %v1664
        %v1667 = vcvt.s32.f32 %v1660
        %v1668 = vmul.f32 %v1667, %v1665
        %v1669 = vxor.u32 %v1668, 2147483648
        %v1670 = vsel %vm1587, %v1669, %v1668
        %v1671 = vsub.s32 4, %v1647
        %v1672 = vsel %vm1587, %v1671, %v1647
        %v1673 = vsel %vm1586, %v230, %v1670
        %v1674 = vsel %vm1586, 0, %v1672
        %v1675 = vcosq.f32.pop %v1673
        %v1676 = vsinq.f32.pop %v1673
        %vm1677 = vweird.f32 %v230
        %v1678 = vadd.s32 %v1674, 3
        %v1679 = vand.u32 %v1678, 3
        %vm1680 = vcmp.lt.s32.totalorder %v1679, 2
        %vm1681 = vcmp.eq.s32.totalorder %v1679, 0
        %v1682 = vxor.u32 %v1676, 2147483648
        %v1683 = vsel %vm1681, %v1675, %v1682
        %vm1684 = vcmp.eq.s32.totalorder %v1679, 2
        %v1685 = vxor.u32 %v1675, 2147483648
        %v1686 = vsel %vm1684, %v1685, %v1676
        %v1687 = vsel %vm1680, %v1683, %v1686
        %v1688 = vsel %vm1677, nan, %v1687
        %v1689 = vand.u32 2147483647, %v231
        %vm1690 = vcmp.le.f32.partialorder %v1689, 0.7853982
        %vm1691 = vcmp.lt.s32.totalorder %v231, 0
        %v1692 = vand.u32 %v231, 2139095040
        %v1693 = vshrl.u32 %v1692, 23
        %v1694 = vsub.s32 %v1693, 127
        %v1695 = vand.u32 2147483647, %v231
        %v1696 = vand.u32 %v1695, 8388607
        %v1697 = vor.u32 %v1696, 8388608
        %v1698 = vsub.s32 0, %v1697
        %v1699 = vadd.s32 %v1694, 1
        %vm1700 = vcmp.gt.s32.totalorder %v1699, 0
        %v1701 = vsel %vm1700, %v1699, 0
        %v1702 = vshrl.u32 %v1701, 5
        %v1703 = vand.u32 %v1701, 31
        %v1704 = vsub.s32 32, %v1703
        %v1705 = vshrl.u32 683565275, %v1704
        %v1706 = vshll.u32 683565275, %v1703
        %v1707 = vshrl.u32 2475754826, %v1704
        %v1708 = vor.u32 %v1706, %v1707
        %v1709 = vshll.u32 2475754826, %v1703
        %v1710 = vshrl.u32 2131351028, %v1704
        %v1711 = vor.u32 %v1709, %v1710
        %v1712 = vshll.u32 2131351028, %v1703
        %v1713 = vshrl.u32 2102212464, %v1704
        %v1714 = vor.u32 %v1712, %v1713
        %v1715 = vshll.u32 2102212464, %v1703
        %v1716 = vshrl.u32 920167782, %v1704
        %v1717 = vor.u32 %v1715, %v1716
        %v1718 = vshll.u32 920167782, %v1703
        %v1719 = vshrl.u32 1326507024, %v1704
        %v1720 = vor.u32 %v1718, %v1719
        %vm1721 = vcmp.lt.s32.totalorder %v1702, 1
        %vm1722 = vcmp.lt.s32.totalorder %v1702, 2
        %vm1723 = vcmp.lt.s32.totalorder %v1702, 3
        %vm1724 = vcmp.lt.s32.totalorder %v1702, 4
        %v1725 = vsel %vm1721, %v1705, %v1708
        %v1726 = vsel %vm1724, %v1714, 2102212464
        %v1727 = vsel %vm1723, %v1711, %v1726
        %v1728 = vsel %vm1722, %v1725, %v1727
        %v1729 = vsel %vm1721, %v1708, %v1711
        %v1730 = vsel %vm1724, %v1717, 920167782
        %v1731 = vsel %vm1723, %v1714, %v1730
        %v1732 = vsel %vm1722, %v1729, %v1731
        %v1733 = vsel %vm1721, %v1711, %v1714
        %v1734 = vsel %vm1724, %v1720, 1326507024
        %v1735 = vsel %vm1723, %v1717, %v1734
        %v1736 = vsel %vm1722, %v1733, %v1735
        %v1737 = vshll.u32 %v1697, 8
        %v1738 = vmul.u32.u64.compose %v1737, %v1736
        %v1739 = vextract.low.u32 %v1738
        %v1740 = vextract.high.u32 %v1738
        %v1741 = vmul.u32.u64.compose %v1737, %v1732
        %v1742 = vextract.low.u32 %v1741
        %v1743 = vextract.high.u32 %v1741
        %v1744 = vmul.u32 %v1737, %v1728
        %v1745 = vadd.s32 %v1740, %v1742
        %vm1746 = vc.u32 %v1740, %v1742
        %v1747 = vadd.s32 %v1743, 1
        %v1748 = vsel %vm1746, %v1747, %v1743
        %v1749 = vadd.s32 %v1744, %v1748
        %v1750 = vadd.s32 %v1749, 536870912
        %v1751 = vshrl.u32 %v1750, 30
        %v1752 = vshll.u32 %v1751, 30
        %v1753 = vsub.s32 %v1749, %v1752
        %vm1754 = vcmp.lt.s32.totalorder %v1753, 0
        %v1755 = vsub.s32 0, %v1753
        %v1756 = vsel %vm1754, %v1755, %v1753
        %v1757 = vclz %v1756
        %v1758 = vsub.s32 %v1757, 2
        %vm1759 = vcmp.gt.s32.totalorder 0, %v1758
        %v1760 = vsel %vm1759, 0, %v1758
        %v1761 = vsub.s32 32, %v1760
        %v1762 = vshll.u32 %v1753, %v1760
        %v1763 = vshrl.u32 %v1745, %v1761
        %v1764 = vor.u32 %v1762, %v1763
        %v1765 = vsub.s32 4294967266, %v1760
        %v1766 = vadd.s32 %v1765, 127
        %v1767 = vshll.u32 %v1766, 23
        %v1768 = vor.u32 4788187, %v1767
        %v1769 = vand.u32 2147483647, %v1768
        %v1771 = vcvt.s32.f32 %v1764
        %v1772 = vmul.f32 %v1771, %v1769
        %v1773 = vxor.u32 %v1772, 2147483648
        %v1774 = vsel %vm1691, %v1773, %v1772
        %v1775 = vsub.s32 4, %v1751
        %v1776 = vsel %vm1691, %v1775, %v1751
        %v1777 = vsel %vm1690, %v231, %v1774
        %v1778 = vsel %vm1690, 0, %v1776
        %v1779 = vcosq.f32.pop %v1777
        %v1780 = vsinq.f32.pop %v1777
        %vm1781 = vweird.f32 %v231
        %v1782 = vadd.s32 %v1778, 3
        %v1783 = vand.u32 %v1782, 3
        %vm1784 = vcmp.lt.s32.totalorder %v1783, 2
        %vm1785 = vcmp.eq.s32.totalorder %v1783, 0
        %v1786 = vxor.u32 %v1780, 2147483648
        %v1787 = vsel %vm1785, %v1779, %v1786
        %vm1788 = vcmp.eq.s32.totalorder %v1783, 2
        %v1789 = vxor.u32 %v1779, 2147483648
        %v1790 = vsel %vm1788, %v1789, %v1780
        %v1791 = vsel %vm1784, %v1787, %v1790
        %v1792 = vsel %vm1781, nan, %v1791
        %v1793 = vand.u32 2147483647, %v232
        %vm1794 = vcmp.le.f32.partialorder %v1793, 0.7853982
        %vm1795 = vcmp.lt.s32.totalorder %v232, 0
        %v1796 = vand.u32 %v232, 2139095040
        %v1797 = vshrl.u32 %v1796, 23
        %v1798 = vsub.s32 %v1797, 127
        %v1799 = vand.u32 2147483647, %v232
        %v1800 = vand.u32 %v1799, 8388607
        %v1801 = vor.u32 %v1800, 8388608
        %v1802 = vsub.s32 0, %v1801
        %v1803 = vadd.s32 %v1798, 1
        %vm1804 = vcmp.gt.s32.totalorder %v1803, 0
        %v1805 = vsel %vm1804, %v1803, 0
        %v1806 = vshrl.u32 %v1805, 5
        %v1807 = vand.u32 %v1805, 31
        %v1808 = vsub.s32 32, %v1807
        %v1809 = vshrl.u32 683565275, %v1808
        %v1810 = vshll.u32 683565275, %v1807
        %v1811 = vshrl.u32 2475754826, %v1808
        %v1812 = vor.u32 %v1810, %v1811
        %v1813 = vshll.u32 2475754826, %v1807
        %v1814 = vshrl.u32 2131351028, %v1808
        %v1815 = vor.u32 %v1813, %v1814
        %v1816 = vshll.u32 2131351028, %v1807
        %v1817 = vshrl.u32 2102212464, %v1808
        %v1818 = vor.u32 %v1816, %v1817
        %v1819 = vshll.u32 2102212464, %v1807
        %v1820 = vshrl.u32 920167782, %v1808
        %v1821 = vor.u32 %v1819, %v1820
        %v1822 = vshll.u32 920167782, %v1807
        %v1823 = vshrl.u32 1326507024, %v1808
        %v1824 = vor.u32 %v1822, %v1823
        %vm1825 = vcmp.lt.s32.totalorder %v1806, 1
        %vm1826 = vcmp.lt.s32.totalorder %v1806, 2
        %vm1827 = vcmp.lt.s32.totalorder %v1806, 3
        %vm1828 = vcmp.lt.s32.totalorder %v1806, 4
        %v1829 = vsel %vm1825, %v1809, %v1812
        %v1830 = vsel %vm1828, %v1818, 2102212464
        %v1831 = vsel %vm1827, %v1815, %v1830
        %v1832 = vsel %vm1826, %v1829, %v1831
        %v1833 = vsel %vm1825, %v1812, %v1815
        %v1834 = vsel %vm1828, %v1821, 920167782
        %v1835 = vsel %vm1827, %v1818, %v1834
        %v1836 = vsel %vm1826, %v1833, %v1835
        %v1837 = vsel %vm1825, %v1815, %v1818
        %v1838 = vsel %vm1828, %v1824, 1326507024
        %v1839 = vsel %vm1827, %v1821, %v1838
        %v1840 = vsel %vm1826, %v1837, %v1839
        %v1841 = vshll.u32 %v1801, 8
        %v1842 = vmul.u32.u64.compose %v1841, %v1840
        %v1843 = vextract.low.u32 %v1842
        %v1844 = vextract.high.u32 %v1842
        %v1845 = vmul.u32.u64.compose %v1841, %v1836
        %v1846 = vextract.low.u32 %v1845
        %v1847 = vextract.high.u32 %v1845
        %v1848 = vmul.u32 %v1841, %v1832
        %v1849 = vadd.s32 %v1844, %v1846
        %vm1850 = vc.u32 %v1844, %v1846
        %v1851 = vadd.s32 %v1847, 1
        %v1852 = vsel %vm1850, %v1851, %v1847
        %v1853 = vadd.s32 %v1848, %v1852
        %v1854 = vadd.s32 %v1853, 536870912
        %v1855 = vshrl.u32 %v1854, 30
        %v1856 = vshll.u32 %v1855, 30
        %v1857 = vsub.s32 %v1853, %v1856
        %vm1858 = vcmp.lt.s32.totalorder %v1857, 0
        %v1859 = vsub.s32 0, %v1857
        %v1860 = vsel %vm1858, %v1859, %v1857
        %v1861 = vclz %v1860
        %v1862 = vsub.s32 %v1861, 2
        %vm1863 = vcmp.gt.s32.totalorder 0, %v1862
        %v1864 = vsel %vm1863, 0, %v1862
        %v1865 = vsub.s32 32, %v1864
        %v1866 = vshll.u32 %v1857, %v1864
        %v1867 = vshrl.u32 %v1849, %v1865
        %v1868 = vor.u32 %v1866, %v1867
        %v1869 = vsub.s32 4294967266, %v1864
        %v1870 = vadd.s32 %v1869, 127
        %v1871 = vshll.u32 %v1870, 23
        %v1872 = vor.u32 4788187, %v1871
        %v1873 = vand.u32 2147483647, %v1872
        %v1875 = vcvt.s32.f32 %v1868
        %v1876 = vmul.f32 %v1875, %v1873
        %v1877 = vxor.u32 %v1876, 2147483648
        %v1878 = vsel %vm1795, %v1877, %v1876
        %v1879 = vsub.s32 4, %v1855
        %v1880 = vsel %vm1795, %v1879, %v1855
        %v1881 = vsel %vm1794, %v232, %v1878
        %v1882 = vsel %vm1794, 0, %v1880
        %v1883 = vcosq.f32.pop %v1881
        %v1884 = vsinq.f32.pop %v1881
        %vm1885 = vweird.f32 %v232
        %v1886 = vadd.s32 %v1882, 3
        %v1887 = vand.u32 %v1886, 3
        %vm1888 = vcmp.lt.s32.totalorder %v1887, 2
        %vm1889 = vcmp.eq.s32.totalorder %v1887, 0
        %v1890 = vxor.u32 %v1884, 2147483648
        %v1891 = vsel %vm1889, %v1883, %v1890
        %vm1892 = vcmp.eq.s32.totalorder %v1887, 2
        %v1893 = vxor.u32 %v1883, 2147483648
        %v1894 = vsel %vm1892, %v1893, %v1884
        %v1895 = vsel %vm1888, %v1891, %v1894
        %v1896 = vsel %vm1885, nan, %v1895
        %1897 = vst [vmem:[%s134] sm:$0xff] %v336
        %1898 = vst [vmem:[%s134 + $0x8] sm:$0xff] %v440
        %1899 = vst [vmem:[%s134 + $0x10] sm:$0xff] %v544
        %1900 = vst [vmem:[%s134 + $0x18] sm:$0xff] %v648
        %1901 = vst [vmem:[%s134 + $0x20] sm:$0xff] %v752
        %1902 = vst [vmem:[%s134 + $0x28] sm:$0xff] %v856
        %1903 = vst [vmem:[%s134 + $0x30] sm:$0xff] %v960
        %1904 = vst [vmem:[%s134 + $0x38] sm:$0xff] %v1064
        %1905 = vst [vmem:[%s134 + $0x40] sm:$0xff] %v1168
        %1906 = vst [vmem:[%s134 + $0x48] sm:$0xff] %v1272
        %1907 = vst [vmem:[%s134 + $0x50] sm:$0xff] %v1376
        %1908 = vst [vmem:[%s134 + $0x58] sm:$0xff] %v1480
        %1909 = vst [vmem:[%s134 + $0x60] sm:$0xff] %v1584
        %1910 = vst [vmem:[%s134 + $0x68] sm:$0xff] %v1688
        %1911 = vst [vmem:[%s134 + $0x70] sm:$0xff] %v1792
        %1912 = vst [vmem:[%s134 + $0x78] sm:$0xff] %v1896
        %s1913 = sand.u32 %s67, 1
        %s1914 = scalar_lea.sflag [#allocation4], %s1913
        %s1915 = sand.u32 %s67, 1
        %s1916 = smul.addr %s1915, 128
        %s1917 = scalar_lea.vmem [#allocation5], %s1916
        // Predicated region
        $region33: #{tpu_custom_call.1} parent=27 // pred_check
          %p1918 = pneg %p77
        $region34: #{tpu_custom_call.1} parent=27 // pred_check_branch
          %1920 = sbr.rel (%p1918) target = $region36
        $region35: #{tpu_custom_call.1} parent=27 // pred_region
          %s1921 = smul.u32 16, %s17
          %s1923 = ssub.s32 2048, 2048
          %1924 = vsyncadd %s1914, %s1923
          %s1925 = smul.addr %s1921, 128
          %s1926 = scalar_lea.hbm %s2, %s1925
          %s1927 = sshll.u32 %s1917, 4
          %s1928 = int_to_ptr.vmem [resolvable:$true] %s1927
          %1933 = dma.vmem_to_hbm [thread:$0]  %s1928, 2048, %s1926, %s1914, 128, 128, 8
        $region36: #{tpu_custom_call.1} parent=27 // pred_fallthru
          _
      $region28: #{tpu_custom_call.1} parent=5 // pred_fallthru
        _
      %p1934 = scmp.le.s32.totalorder 2, %s12
      // Predicated region
      $region37: #{tpu_custom_call.1} parent=5 // pred_check
        %p1935 = pneg %p1934
      $region38: #{tpu_custom_call.1} parent=5 // pred_check_branch
        %1937 = sbr.rel (%p1935) target = $region40
      $region39: #{tpu_custom_call.1} parent=5 // pred_region
        %s1938 = ssub.s32 %s12, 2
        // Predicated region
        $region41: #{tpu_custom_call.1} parent=39 // pred_check
          %p1939 = pneg %p83
        $region42: #{tpu_custom_call.1} parent=39 // pred_check_branch
          %1941 = sbr.rel (%p1939) target = $region44
        $region43: #{tpu_custom_call.1} parent=39 // pred_region
          %s1942 = sand.u32 %s68, 1
          %s1943 = scalar_lea.sflag [#allocation4], %s1942
          %s1944 = sand.u32 %s68, 1
          %s1945 = smul.addr %s1944, 128
          %s1946 = scalar_lea.vmem [#allocation5], %s1945
          %1947 = dma.done %s1943, 2048
        $region44: #{tpu_custom_call.1} parent=39 // pred_fallthru
          _
      $region40: #{tpu_custom_call.1} parent=5 // pred_fallthru
        _
    $region6: #{tpu_custom_call.1} parent=1 // loop_footer
      %s16 = sadd.s32 1, %s12
    $region7: #{tpu_custom_call.1} parent=1 // loop_footer_branch
      %11 = sbr.rel target = $region3
    $region8: #{tpu_custom_call.1} parent=1 // loop_exit
      _
    %1948 = vsyncpa [#allocation3], 1
    %s1949 = scalar_lea.sflag [#allocation3], 1
    %1950 = vsyncpa %s1949, 1
    %1951 = vsyncpa [#allocation4], 1
    %s1952 = scalar_lea.sflag [#allocation4], 1
    %1953 = vsyncpa %s1952, 1

</llo_original>
